<compile_context>
chip_gen: v6e
topology: v6e:2x2x1
jax: 0.10.0
libtpu: 0.0.40
codegen_flags: <defaults>
</compile_context>

<pallas_src>
import functools
import math

import numpy as np
import jax
import jax.numpy as jnp
from jax.experimental import pallas as pl
from jax.experimental.pallas import tpu as pltpu

MIN_VALUE = float(np.finfo(np.float32).min)


# ---------------------------------------------------------------------------
# Kernel
# ---------------------------------------------------------------------------
def _mha_kernel(*refs, g_heads, d_k, has_mask, matmul_dtype):
    """One grid step = (batch b, query tile qi, head-group hg)."""
    if has_mask:
        (q_ref, k_ref, v_ref, m_ref,
         wq_ref, bq_ref, wk_ref, bk_ref, wv_ref, bv_ref, wo_ref, bo_ref,
         o_ref, acc_ref, ctx_ref, kc_ref, vc_ref) = refs
    else:
        (q_ref, k_ref, v_ref,
         wq_ref, bq_ref, wk_ref, bk_ref, wv_ref, bv_ref, wo_ref, bo_ref,
         o_ref, acc_ref, ctx_ref, kc_ref, vc_ref) = refs
        m_ref = None

    qi = pl.program_id(1)
    hg = pl.program_id(2)

    cast = (lambda x: x) if matmul_dtype is None else (
        lambda x: x.astype(matmul_dtype))

    @pl.when(hg == 0)
    def _init_acc():
        acc_ref[...] = jnp.zeros_like(acc_ref)

    # K/V head-group projection: computed once per (batch, head-group) on the
    # FIRST query tile, cached in VMEM scratch and reused for all later tiles.
    @pl.when(qi == 0)
    def _project_kv():
        kh = jnp.dot(cast(k_ref[0]), cast(wk_ref[hg]),
                     preferred_element_type=jnp.float32) + bk_ref[hg]
        vh = jnp.dot(cast(v_ref[0]), cast(wv_ref[hg]),
                     preferred_element_type=jnp.float32) + bv_ref[hg]
        kc_ref[hg] = kh.astype(kc_ref.dtype)
        vc_ref[hg] = vh.astype(vc_ref.dtype)

    # Q projection for this tile / head group (1/sqrt(d_k) folded into Wq, bq).
    qh = jnp.dot(cast(q_ref[0]), cast(wq_ref[hg]),
                 preferred_element_type=jnp.float32) + bq_ref[hg]   # (Tq, G*d_k)
    kh = kc_ref[hg]                                                 # (T2, G*d_k)
    vh = vc_ref[hg]

    if has_mask:
        keep = m_ref[0] != 0          # (Tq, T2) or (1, T2): broadcast below

    # Per-head attention inside the group (static, unrolled).
    for g in range(g_heads):
        lo = g * d_k
        qg = cast(qh[:, lo:lo + d_k])
        kg = cast(kh[:, lo:lo + d_k])
        vg = cast(vh[:, lo:lo + d_k])
        s = jnp.einsum('qd,kd->qk', qg, kg,
                       preferred_element_type=jnp.float32)          # (Tq, T2)
        if has_mask:
            s = jnp.where(keep, s, MIN_VALUE)                       # masked_fill
        s_max = jnp.max(s, axis=-1, keepdims=True)
        p = jnp.exp(s - s_max)                                      # f32 stats
        denom = jnp.sum(p, axis=-1, keepdims=True)
        inv = pl.reciprocal(denom, approx=True)                     # EUP slot
        inv = inv * (2.0 - denom * inv)                             # Newton step
        ctx_ref[:, lo:lo + d_k] = (
            jnp.dot(cast(p), vg, preferred_element_type=jnp.float32) * inv)

    # Output projection, accumulated over head groups (Gd-deep contraction).
    acc_ref[...] += jnp.dot(cast(ctx_ref[...]), cast(wo_ref[hg]),
                            preferred_element_type=jnp.float32)

    @pl.when(hg == pl.num_programs(2) - 1)
    def _finish():
        o_ref[0] = (acc_ref[...] + bo_ref[...]).astype(o_ref.dtype)


# ---------------------------------------------------------------------------
# Host-side preparation (one-time, at model load)
# ---------------------------------------------------------------------------
def _pick_heads_per_group(n_head, d_k, target_lanes=256):
    """Largest divisor G of n_head with G*d_k <= target_lanes (lane-dense MXU)."""
    best = 1
    for g in range(1, n_head + 1):
        if n_head % g == 0 and g * d_k <= max(target_lanes, d_k):
            best = g
    return best


def prepare_mha_params(params, n_head, heads_per_group=None):
    """Transpose PyTorch (out,in) weights to (in,out), split per head-group so
    kernel weight blocks are lane-dense, fold 1/sqrt(d_k) into Wq/bq."""
    F = params['wq'].shape[0]
    d_k = F // n_head
    G = (heads_per_group if heads_per_group is not None
         else _pick_heads_per_group(n_head, d_k))
    assert n_head % G == 0
    HG = n_head // G
    Gd = G * d_k
    scale = 1.0 / math.sqrt(d_k)

    def per_group_w(w_pt):                    # (out,in) -> (HG, F_in, G*d_k)
        return jnp.asarray(w_pt).T.reshape(F, HG, Gd).transpose(1, 0, 2)

    def per_group_b(b):                       # (F,) -> (HG, 1, G*d_k)
        return jnp.asarray(b).reshape(HG, 1, Gd)

    return {
        'wq': per_group_w(params['wq']) * scale,
        'bq': per_group_b(params['bq']) * scale,
        'wk': per_group_w(params['wk']),
        'bk': per_group_b(params['bk']),
        'wv': per_group_w(params['wv']),
        'bv': per_group_b(params['bv']),
        'wo': jnp.asarray(params['wo']).T.reshape(HG, Gd, F),   # (HG, G*d_k, F)
        'bo': jnp.asarray(params['bo'])[None, :],               # (1, F)
        'n_head': n_head,
        'heads_per_group': G,
    }


def _pick_q_tile(t1):
    for cand in (512, 256, 128, 64, 32, 16, 8):
        if t1 % cand == 0:
            return cand
    return t1   # fall back to the full (untiled) axis


def _vmem_limit_bytes(tq, t2, f, gd, hg, act_item, cache_item,
                      has_mask, mask_bcast):
    dbl = 2  # Pallas double-buffers each BlockSpec operand
    act_blocks = (tq * f + 2 * t2 * f + tq * f) * act_item       # q, k, v, out
    if has_mask:
        act_blocks += (t2 if mask_bcast else tq * t2) * 4
    weight_blocks = (3 * (hg * f * gd + hg * gd) + hg * gd * f + f) * 4
    scratch = tq * f * 4 + tq * gd * 4 + 2 * hg * t2 * gd * cache_item
    # in-kernel temporaries: scores / exp / select (Tq,T2) f32, qh/kh/vh, acc
    temps = 4 * tq * t2 * 4 + (tq + 2 * t2) * gd * 4 + 2 * tq * f * 4
    est = dbl * (act_blocks + weight_blocks) + scratch + temps
    try:
        phys = pltpu.get_tpu_info().vmem_capacity_bytes
    except Exception:
        phys = 64 * 1024 * 1024
    cap = int(phys * 0.85)          # leave headroom for compiler scratch
    want = int(1.5 * est) + (8 << 20)
    return max(min(want, cap), 16 << 20)


# ---------------------------------------------------------------------------
# Wrapper
# ---------------------------------------------------------------------------
def multi_headed_attention(query, key, value, mask, prepared, *,
                           q_tile=None, matmul_dtype=jnp.bfloat16):
    """query: (B,T1,F), key/value: (B,T2,F), mask: (B,T1,T2) / (B,1,T2) / None
    (nonzero = keep).  `prepared` comes from prepare_mha_params (call once).
    matmul_dtype=None gives an exact-f32 path; bf16 casts MXU operands only."""
    B, T1, F = query.shape
    T2 = key.shape[1]
    HG, _, Gd = prepared['wq'].shape
    G = prepared['heads_per_group']
    d_k = Gd // G
    Tq = q_tile if q_tile is not None else _pick_q_tile(T1)
    assert T1 % Tq == 0, "query tile must divide time1"
    has_mask = mask is not None

    inputs = [query, key, value]
    in_specs = [
        pl.BlockSpec((1, Tq, F), lambda b, qi, hg: (b, qi, 0)),
        pl.BlockSpec((1, T2, F), lambda b, qi, hg: (b, 0, 0)),
        pl.BlockSpec((1, T2, F), lambda b, qi, hg: (b, 0, 0)),
    ]
    mask_bcast = False
    if has_mask:
        if mask.ndim == 2:                    # (B, T2) key-padding mask
            mask = mask[:, None, :]
        # f32 "keep" mask; pass a float32 mask to make this conversion a no-op.
        mask_f = mask if mask.dtype == jnp.float32 else (
            (mask != 0).astype(jnp.float32))
        mask_bcast = mask_f.shape[1] == 1
        if mask_bcast:
            in_specs.append(pl.BlockSpec((1, 1, T2), lambda b, qi, hg: (b, 0, 0)))
        else:
            in_specs.append(pl.BlockSpec((1, Tq, T2), lambda b, qi, hg: (b, qi, 0)))
        inputs.append(mask_f)

    inputs += [prepared['wq'], prepared['bq'], prepared['wk'], prepared['bk'],
               prepared['wv'], prepared['bv'], prepared['wo'], prepared['bo']]
    # Full weight/bias arrays stay VMEM-resident (constant index_map); the
    # head-group axis is indexed in-kernel, so HBM weight traffic is paid once.
    w_spec = pl.BlockSpec((HG, F, Gd), lambda b, qi, hg: (0, 0, 0))
    b_spec = pl.BlockSpec((HG, 1, Gd), lambda b, qi, hg: (0, 0, 0))
    wo_spec = pl.BlockSpec((HG, Gd, F), lambda b, qi, hg: (0, 0, 0))
    bo_spec = pl.BlockSpec((1, F), lambda b, qi, hg: (0, 0))
    in_specs += [w_spec, b_spec, w_spec, b_spec, w_spec, b_spec, wo_spec, bo_spec]

    cache_dtype = jnp.float32 if matmul_dtype is None else matmul_dtype
    kernel = functools.partial(_mha_kernel, g_heads=G, d_k=d_k,
                               has_mask=has_mask, matmul_dtype=matmul_dtype)

    return pl.pallas_call(
        kernel,
        out_shape=jax.ShapeDtypeStruct((B, T1, F), query.dtype),
        grid_spec=pltpu.PrefetchScalarGridSpec(
            num_scalar_prefetch=0,
            grid=(B, T1 // Tq, HG),      # head-group innermost (output reduction)
            in_specs=in_specs,
            out_specs=pl.BlockSpec((1, Tq, F), lambda b, qi, hg: (b, qi, 0)),
            scratch_shapes=[
                pltpu.VMEM((Tq, F), jnp.float32),        # output-proj accumulator
                pltpu.VMEM((Tq, Gd), jnp.float32),       # assembled group context
                pltpu.VMEM((HG, T2, Gd), cache_dtype),   # cached K projections
                pltpu.VMEM((HG, T2, Gd), cache_dtype),   # cached V projections
            ],
        ),
        compiler_params=pltpu.CompilerParams(
            # qi and hg must stay sequential per core: qi==0 fills the K/V cache
            # and hg carries the output-projection reduction.
            dimension_semantics=("parallel", "arbitrary", "arbitrary"),
            vmem_limit_bytes=_vmem_limit_bytes(
                Tq, T2, F, Gd, HG, query.dtype.itemsize,
                jnp.dtype(cache_dtype).itemsize, has_mask, mask_bcast),
        ),
    )(*inputs)


# ---------------------------------------------------------------------------
# Pure-JAX reference (replicates the PyTorch forward, eval-mode dropout)
# ---------------------------------------------------------------------------
def _reference(query, key, value, mask, params, *, n_head):
    B, T1, F = query.shape
    d_k = F // n_head
    with jax.default_matmul_precision("float32"):
        def lin(x, w, b):
            return x @ w.T + b
        q = lin(query, params['wq'], params['bq']).reshape(B, -1, n_head, d_k).transpose(0, 2, 1, 3)
        k = lin(key, params['wk'], params['bk']).reshape(B, -1, n_head, d_k).transpose(0, 2, 1, 3)
        v = lin(value, params['wv'], params['bv']).reshape(B, -1, n_head, d_k).transpose(0, 2, 1, 3)
        scores = jnp.einsum('bhtd,bhsd->bhts', q, k) / math.sqrt(d_k)
        if mask is not None:
            scores = jnp.where(mask[:, None, :, :] == 0, MIN_VALUE, scores)
        attn = jax.nn.softmax(scores, axis=-1)
        x = jnp.einsum('bhts,bhsd->bhtd', attn, v)
        x = x.transpose(0, 2, 1, 3).reshape(B, -1, F)
        return lin(x, params['wo'], params['bo'])


if __name__ == "__main__":
    # Small shapes consistent with the module: batch=2, seq=8, hidden=32, heads=4
    B, T1, T2, F, H = 2, 8, 8, 32, 4
    key0 = jax.random.PRNGKey(0)
    ks = jax.random.split(key0, 12)

    scale = 1.0 / math.sqrt(F)
    params = {
        'wq': jax.random.normal(ks[0], (F, F), jnp.float32) * scale,
        'bq': jax.random.normal(ks[1], (F,), jnp.float32) * scale,
        'wk': jax.random.normal(ks[2], (F, F), jnp.float32) * scale,
        'bk': jax.random.normal(ks[3], (F,), jnp.float32) * scale,
        'wv': jax.random.normal(ks[4], (F, F), jnp.float32) * scale,
        'bv': jax.random.normal(ks[5], (F,), jnp.float32) * scale,
        'wo': jax.random.normal(ks[6], (F, F), jnp.float32) * scale,
        'bo': jax.random.normal(ks[7], (F,), jnp.float32) * scale,
    }
    prepared = prepare_mha_params(params, H)   # one-time host-side prep

    query = jax.random.normal(ks[8], (B, T1, F), jnp.float32)
    key_t = jax.random.normal(ks[9], (B, T2, F), jnp.float32)
    value = jax.random.normal(ks[10], (B, T2, F), jnp.float32)
    # mask: (B, T1, T2), nonzero = keep (pad on the last two key positions)
    mask_full = jnp.ones((B, T1, T2), jnp.float32).at[:, :, -2:].set(0.0)
    # key-padding mask: (B, 1, T2)
    mask_pad = jnp.ones((B, 1, T2), jnp.float32).at[:, :, -2:].set(0.0)

    ref_full = _reference(query, key_t, value, mask_full, params, n_head=H)
    ref_pad = _reference(query, key_t, value, mask_pad, params, n_head=H)
    ref_none = _reference(query, key_t, value, None, params, n_head=H)

    # 1) exact-f32 path, full (B,T1,T2) mask
    out = jax.block_until_ready(multi_headed_attention(
        query, key_t, value, mask_full, prepared, matmul_dtype=None))
    assert out.shape == (B, T1, F)
    np.testing.assert_allclose(np.asarray(out), np.asarray(ref_full),
                               rtol=1e-3, atol=1e-3)

    # 2) exact-f32 path, broadcast (B,1,T2) key-padding mask
    out_pad = jax.block_until_ready(multi_headed_attention(
        query, key_t, value, mask_pad, prepared, matmul_dtype=None))
    np.testing.assert_allclose(np.asarray(out_pad), np.asarray(ref_pad),
                               rtol=1e-3, atol=1e-3)

    # 3) exact-f32 path, mask=None
    out_nm = jax.block_until_ready(multi_headed_attention(
        query, key_t, value, None, prepared, matmul_dtype=None))
    np.testing.assert_allclose(np.asarray(out_nm), np.asarray(ref_none),
                               rtol=1e-3, atol=1e-3)

    # 4) default fast path (bf16 MXU operands, f32 accumulation / softmax)
    out_bf = jax.block_until_ready(multi_headed_attention(
        query, key_t, value, mask_full, prepared))
    np.testing.assert_allclose(np.asarray(out_bf), np.asarray(ref_full),
                               rtol=5e-2, atol=5e-2)

    print("KERNEL_OK")
</pallas_src>

<mosaic_0001>
module attributes {stable_mosaic.version = 11 : i64} {
  func.func @_mha_kernel(%arg0: i32, %arg1: i32, %arg2: i32, %arg3: memref<1x8x32xf32, #tpu.memory_space<vmem>>, %arg4: memref<1x8x32xf32, #tpu.memory_space<vmem>>, %arg5: memref<1x8x32xf32, #tpu.memory_space<vmem>>, %arg6: memref<1x8x8xf32, #tpu.memory_space<vmem>>, %arg7: memref<1x32x32xf32, #tpu.memory_space<vmem>>, %arg8: memref<1x1x32xf32, #tpu.memory_space<vmem>>, %arg9: memref<1x32x32xf32, #tpu.memory_space<vmem>>, %arg10: memref<1x1x32xf32, #tpu.memory_space<vmem>>, %arg11: memref<1x32x32xf32, #tpu.memory_space<vmem>>, %arg12: memref<1x1x32xf32, #tpu.memory_space<vmem>>, %arg13: memref<1x32x32xf32, #tpu.memory_space<vmem>>, %arg14: memref<1x32xf32, #tpu.memory_space<vmem>>, %arg15: memref<1x8x32xf32, #tpu.memory_space<vmem>>, %arg16: memref<8x32xf32, #tpu.memory_space<vmem>>, %arg17: memref<8x32xf32, #tpu.memory_space<vmem>>, %arg18: memref<1x8x32xf32, #tpu.memory_space<vmem>>, %arg19: memref<1x8x32xf32, #tpu.memory_space<vmem>>) attributes {dimension_semantics = [#tpu.dimension_semantics<parallel>, #tpu.dimension_semantics<arbitrary>, #tpu.dimension_semantics<arbitrary>], iteration_bounds = array<i64: 2, 1, 1>, scalar_prefetch = 0 : i64, scratch_operands = 4 : i64, tpu.core_type = #tpu.core_type<tc>, window_params = [{transform_indices = @transform_0, window_bounds = array<i64: 1, 8, 32>}, {transform_indices = @transform_1, window_bounds = array<i64: 1, 8, 32>}, {transform_indices = @transform_2, window_bounds = array<i64: 1, 8, 32>}, {transform_indices = @transform_3, window_bounds = array<i64: 1, 8, 8>}, {pipeline_mode = #tpu.pipeline_mode<synchronous>, transform_indices = @transform_4, window_bounds = array<i64: 1, 32, 32>}, {pipeline_mode = #tpu.pipeline_mode<synchronous>, transform_indices = @transform_5, window_bounds = array<i64: 1, 1, 32>}, {pipeline_mode = #tpu.pipeline_mode<synchronous>, transform_indices = @transform_6, window_bounds = array<i64: 1, 32, 32>}, {pipeline_mode = #tpu.pipeline_mode<synchronous>, transform_indices = @transform_7, window_bounds = array<i64: 1, 1, 32>}, {pipeline_mode = #tpu.pipeline_mode<synchronous>, transform_indices = @transform_8, window_bounds = array<i64: 1, 32, 32>}, {pipeline_mode = #tpu.pipeline_mode<synchronous>, transform_indices = @transform_9, window_bounds = array<i64: 1, 1, 32>}, {pipeline_mode = #tpu.pipeline_mode<synchronous>, transform_indices = @transform_10, window_bounds = array<i64: 1, 32, 32>}, {pipeline_mode = #tpu.pipeline_mode<synchronous>, transform_indices = @transform_11, window_bounds = array<i64: 1, 32>}, {transform_indices = @transform_12, window_bounds = array<i64: 1, 8, 32>}]} {
    %c0_i32 = arith.constant 0 : i32
    %0 = arith.cmpi eq, %arg2, %c0_i32 : i32
    %1 = arith.extui %0 : i1 to i32
    %c0_i32_0 = arith.constant 0 : i32
    %2 = arith.cmpi ne, %1, %c0_i32_0 : i32
    scf.if %2 {
      %cst_57 = arith.constant 0.000000e+00 : f32
      %126 = vector.broadcast %cst_57 : f32 to vector<8x32xf32>
      %c0_58 = arith.constant 0 : index
      %c0_59 = arith.constant 0 : index
      %127 = vector.load %arg16[%c0_58, %c0_59] : memref<8x32xf32, #tpu.memory_space<vmem>>, vector<8x32xf32>
      tpu.vector_store %arg16[%c0_58, %c0_59], %126 {strides = array<i32>} : memref<8x32xf32, #tpu.memory_space<vmem>>, vector<8x32xf32>,
    } else {
    }
    %c0_i32_1 = arith.constant 0 : i32
    %3 = arith.cmpi eq, %arg1, %c0_i32_1 : i32
    %4 = arith.extui %3 : i1 to i32
    %c0_i32_2 = arith.constant 0 : i32
    %5 = arith.cmpi ne, %4, %c0_i32_2 : i32
    scf.if %5 {
      %c0_57 = arith.constant 0 : index
      %c0_58 = arith.constant 0 : index
      %c0_59 = arith.constant 0 : index
      %126 = vector.load %arg4[%c0_57, %c0_58, %c0_59] : memref<1x8x32xf32, #tpu.memory_space<vmem>>, vector<1x8x32xf32>
      %127 = vector.shape_cast %126 : vector<1x8x32xf32> to vector<8x32xf32>
      %128 = arith.index_cast %arg2 : i32 to index
      %c0_60 = arith.constant 0 : index
      %c0_61 = arith.constant 0 : index
      %129 = vector.load %arg9[%128, %c0_60, %c0_61] : memref<1x32x32xf32, #tpu.memory_space<vmem>>, vector<1x32x32xf32>
      %130 = vector.shape_cast %129 : vector<1x32x32xf32> to vector<32x32xf32>
      %cst_62 = arith.constant dense<0.000000e+00> : vector<8x32xf32>
      %131 = tpu.matmul %127, %130, %cst_62 {dimension_numbers = #tpu.dot_dimension_numbers<[1], [0], [0], [1], [0, 0, 1, 1], [], []>} : vector<8x32xf32>, vector<32x32xf32>, vector<8x32xf32> -> vector<8x32xf32>
      %132 = arith.index_cast %arg2 : i32 to index
      %c0_63 = arith.constant 0 : index
      %c0_64 = arith.constant 0 : index
      %133 = vector.load %arg10[%132, %c0_63, %c0_64] : memref<1x1x32xf32, #tpu.memory_space<vmem>>, vector<1x1x32xf32>
      %134 = vector.shape_cast %133 : vector<1x1x32xf32> to vector<1x32xf32>
      %135 = vector.broadcast %134 : vector<1x32xf32> to vector<8x32xf32>
      %136 = arith.addf %131, %135 : vector<8x32xf32>
      %c0_65 = arith.constant 0 : index
      %c0_66 = arith.constant 0 : index
      %c0_67 = arith.constant 0 : index
      %137 = vector.load %arg5[%c0_65, %c0_66, %c0_67] : memref<1x8x32xf32, #tpu.memory_space<vmem>>, vector<1x8x32xf32>
      %138 = vector.shape_cast %137 : vector<1x8x32xf32> to vector<8x32xf32>
      %139 = arith.index_cast %arg2 : i32 to index
      %c0_68 = arith.constant 0 : index
      %c0_69 = arith.constant 0 : index
      %140 = vector.load %arg11[%139, %c0_68, %c0_69] : memref<1x32x32xf32, #tpu.memory_space<vmem>>, vector<1x32x32xf32>
      %141 = vector.shape_cast %140 : vector<1x32x32xf32> to vector<32x32xf32>
      %cst_70 = arith.constant dense<0.000000e+00> : vector<8x32xf32>
      %142 = tpu.matmul %138, %141, %cst_70 {dimension_numbers = #tpu.dot_dimension_numbers<[1], [0], [0], [1], [0, 0, 1, 1], [], []>} : vector<8x32xf32>, vector<32x32xf32>, vector<8x32xf32> -> vector<8x32xf32>
      %143 = arith.index_cast %arg2 : i32 to index
      %c0_71 = arith.constant 0 : index
      %c0_72 = arith.constant 0 : index
      %144 = vector.load %arg12[%143, %c0_71, %c0_72] : memref<1x1x32xf32, #tpu.memory_space<vmem>>, vector<1x1x32xf32>
      %145 = vector.shape_cast %144 : vector<1x1x32xf32> to vector<1x32xf32>
      %146 = vector.broadcast %145 : vector<1x32xf32> to vector<8x32xf32>
      %147 = arith.addf %142, %146 : vector<8x32xf32>
      %148 = arith.index_cast %arg2 : i32 to index
      %c0_73 = arith.constant 0 : index
      %c0_74 = arith.constant 0 : index
      %149 = vector.load %arg18[%148, %c0_73, %c0_74] : memref<1x8x32xf32, #tpu.memory_space<vmem>>, vector<1x8x32xf32>
      %150 = vector.shape_cast %149 : vector<1x8x32xf32> to vector<8x32xf32>
      %151 = vector.shape_cast %136 : vector<8x32xf32> to vector<1x8x32xf32>
      tpu.vector_store %arg18[%148, %c0_73, %c0_74], %151 {strides = array<i32>} : memref<1x8x32xf32, #tpu.memory_space<vmem>>, vector<1x8x32xf32>,
      %152 = arith.index_cast %arg2 : i32 to index
      %c0_75 = arith.constant 0 : index
      %c0_76 = arith.constant 0 : index
      %153 = vector.load %arg19[%152, %c0_75, %c0_76] : memref<1x8x32xf32, #tpu.memory_space<vmem>>, vector<1x8x32xf32>
      %154 = vector.shape_cast %153 : vector<1x8x32xf32> to vector<8x32xf32>
      %155 = vector.shape_cast %147 : vector<8x32xf32> to vector<1x8x32xf32>
      tpu.vector_store %arg19[%152, %c0_75, %c0_76], %155 {strides = array<i32>} : memref<1x8x32xf32, #tpu.memory_space<vmem>>, vector<1x8x32xf32>,
    } else {
    }
    %c0 = arith.constant 0 : index
    %c0_3 = arith.constant 0 : index
    %c0_4 = arith.constant 0 : index
    %6 = vector.load %arg3[%c0, %c0_3, %c0_4] : memref<1x8x32xf32, #tpu.memory_space<vmem>>, vector<1x8x32xf32>
    %7 = vector.shape_cast %6 : vector<1x8x32xf32> to vector<8x32xf32>
    %8 = arith.index_cast %arg2 : i32 to index
    %c0_5 = arith.constant 0 : index
    %c0_6 = arith.constant 0 : index
    %9 = vector.load %arg7[%8, %c0_5, %c0_6] : memref<1x32x32xf32, #tpu.memory_space<vmem>>, vector<1x32x32xf32>
    %10 = vector.shape_cast %9 : vector<1x32x32xf32> to vector<32x32xf32>
    %cst = arith.constant dense<0.000000e+00> : vector<8x32xf32>
    %11 = tpu.matmul %7, %10, %cst {dimension_numbers = #tpu.dot_dimension_numbers<[1], [0], [0], [1], [0, 0, 1, 1], [], []>} : vector<8x32xf32>, vector<32x32xf32>, vector<8x32xf32> -> vector<8x32xf32>
    %12 = arith.index_cast %arg2 : i32 to index
    %c0_7 = arith.constant 0 : index
    %c0_8 = arith.constant 0 : index
    %13 = vector.load %arg8[%12, %c0_7, %c0_8] : memref<1x1x32xf32, #tpu.memory_space<vmem>>, vector<1x1x32xf32>
    %14 = vector.shape_cast %13 : vector<1x1x32xf32> to vector<1x32xf32>
    %15 = vector.broadcast %14 : vector<1x32xf32> to vector<8x32xf32>
    %16 = arith.addf %11, %15 : vector<8x32xf32>
    %17 = arith.index_cast %arg2 : i32 to index
    %c0_9 = arith.constant 0 : index
    %c0_10 = arith.constant 0 : index
    %18 = vector.load %arg18[%17, %c0_9, %c0_10] : memref<1x8x32xf32, #tpu.memory_space<vmem>>, vector<1x8x32xf32>
    %19 = vector.shape_cast %18 : vector<1x8x32xf32> to vector<8x32xf32>
    %20 = arith.index_cast %arg2 : i32 to index
    %c0_11 = arith.constant 0 : index
    %c0_12 = arith.constant 0 : index
    %21 = vector.load %arg19[%20, %c0_11, %c0_12] : memref<1x8x32xf32, #tpu.memory_space<vmem>>, vector<1x8x32xf32>
    %22 = vector.shape_cast %21 : vector<1x8x32xf32> to vector<8x32xf32>
    %c0_13 = arith.constant 0 : index
    %c0_14 = arith.constant 0 : index
    %c0_15 = arith.constant 0 : index
    %23 = vector.load %arg6[%c0_13, %c0_14, %c0_15] : memref<1x8x8xf32, #tpu.memory_space<vmem>>, vector<1x8x8xf32>
    %24 = vector.shape_cast %23 : vector<1x8x8xf32> to vector<8x8xf32>
    %cst_16 = arith.constant 0.000000e+00 : f32
    %25 = vector.broadcast %cst_16 : f32 to vector<8x8xf32>
    %26 = arith.cmpf one, %24, %25 : vector<8x8xf32>
    %27 = vector.extract_strided_slice %16 {offsets = [0, 0], sizes = [8, 8], strides = [1, 1]} : vector<8x32xf32> to vector<8x8xf32>
    %28 = vector.extract_strided_slice %19 {offsets = [0, 0], sizes = [8, 8], strides = [1, 1]} : vector<8x32xf32> to vector<8x8xf32>
    %29 = vector.extract_strided_slice %22 {offsets = [0, 0], sizes = [8, 8], strides = [1, 1]} : vector<8x32xf32> to vector<8x8xf32>
    "tpu.trace_start"() <{level = 10 : i32, message = "qd,kd->qk"}> : () -> ()
    %cst_17 = arith.constant dense<0.000000e+00> : vector<8x8xf32>
    %30 = tpu.matmul %27, %28, %cst_17 {dimension_numbers = #tpu.dot_dimension_numbers<[1], [1], [0], [0], [0, 0, 1, 0], [], []>} : vector<8x8xf32>, vector<8x8xf32>, vector<8x8xf32> -> vector<8x8xf32>
    %cst_18 = arith.constant -3.40282347E+38 : f32
    "tpu.trace_stop"() : () -> ()
    %31 = vector.broadcast %cst_18 : f32 to vector<8x8xf32>
    %32 = arith.select %26, %30, %31 : vector<8x8xi1>, vector<8x8xf32>
    %cst_19 = arith.constant dense<0xFF800000> : vector<8xf32>
    %33 = vector.multi_reduction <maximumf>, %32, %cst_19 [1] : vector<8x8xf32> to vector<8xf32>
    %34 = vector.shape_cast %33 : vector<8xf32> to vector<8x1xf32>
    %35 = vector.broadcast %34 : vector<8x1xf32> to vector<8x8xf32>
    %36 = arith.subf %32, %35 : vector<8x8xf32>
    %37 = math.exp %36 : vector<8x8xf32>
    %cst_20 = arith.constant dense<0.000000e+00> : vector<8xf32>
    %38 = vector.multi_reduction <add>, %37, %cst_20 [1] : vector<8x8xf32> to vector<8xf32>
    %39 = vector.shape_cast %38 : vector<8xf32> to vector<8x1xf32>
    %40 = tpu.reciprocal %39 {approx = true} : vector<8x1xf32> -> vector<8x1xf32>
    %41 = arith.mulf %39, %40 : vector<8x1xf32>
    %cst_21 = arith.constant 2.000000e+00 : f32
    %42 = vector.broadcast %cst_21 : f32 to vector<8x1xf32>
    %43 = arith.subf %42, %41 : vector<8x1xf32>
    %44 = arith.mulf %40, %43 : vector<8x1xf32>
    %cst_22 = arith.constant dense<0.000000e+00> : vector<8x8xf32>
    %45 = tpu.matmul %37, %29, %cst_22 {dimension_numbers = #tpu.dot_dimension_numbers<[1], [0], [0], [1], [0, 0, 1, 1], [], []>} : vector<8x8xf32>, vector<8x8xf32>, vector<8x8xf32> -> vector<8x8xf32>
    %46 = vector.broadcast %44 : vector<8x1xf32> to vector<8x8xf32>
    %47 = arith.mulf %45, %46 : vector<8x8xf32>
    %c0_23 = arith.constant 0 : index
    %c0_24 = arith.constant 0 : index
    %48 = vector.load %arg17[%c0_23, %c0_24] : memref<8x32xf32, #tpu.memory_space<vmem>>, vector<8x8xf32>
    tpu.vector_store %arg17[%c0_23, %c0_24], %47 {strides = array<i32>} : memref<8x32xf32, #tpu.memory_space<vmem>>, vector<8x8xf32>,
    %49 = vector.extract_strided_slice %16 {offsets = [0, 8], sizes = [8, 8], strides = [1, 1]} : vector<8x32xf32> to vector<8x8xf32>
    %50 = vector.extract_strided_slice %19 {offsets = [0, 8], sizes = [8, 8], strides = [1, 1]} : vector<8x32xf32> to vector<8x8xf32>
    %51 = vector.extract_strided_slice %22 {offsets = [0, 8], sizes = [8, 8], strides = [1, 1]} : vector<8x32xf32> to vector<8x8xf32>
    "tpu.trace_start"() <{level = 10 : i32, message = "qd,kd->qk"}> : () -> ()
    %cst_25 = arith.constant dense<0.000000e+00> : vector<8x8xf32>
    %52 = tpu.matmul %49, %50, %cst_25 {dimension_numbers = #tpu.dot_dimension_numbers<[1], [1], [0], [0], [0, 0, 1, 0], [], []>} : vector<8x8xf32>, vector<8x8xf32>, vector<8x8xf32> -> vector<8x8xf32>
    %cst_26 = arith.constant -3.40282347E+38 : f32
    "tpu.trace_stop"() : () -> ()
    %53 = vector.broadcast %cst_26 : f32 to vector<8x8xf32>
    %54 = arith.select %26, %52, %53 : vector<8x8xi1>, vector<8x8xf32>
    %cst_27 = arith.constant dense<0xFF800000> : vector<8xf32>
    %55 = vector.multi_reduction <maximumf>, %54, %cst_27 [1] : vector<8x8xf32> to vector<8xf32>
    %56 = vector.shape_cast %55 : vector<8xf32> to vector<8x1xf32>
    %57 = vector.broadcast %56 : vector<8x1xf32> to vector<8x8xf32>
    %58 = arith.subf %54, %57 : vector<8x8xf32>
    %59 = math.exp %58 : vector<8x8xf32>
    %cst_28 = arith.constant dense<0.000000e+00> : vector<8xf32>
    %60 = vector.multi_reduction <add>, %59, %cst_28 [1] : vector<8x8xf32> to vector<8xf32>
    %61 = vector.shape_cast %60 : vector<8xf32> to vector<8x1xf32>
    %62 = tpu.reciprocal %61 {approx = true} : vector<8x1xf32> -> vector<8x1xf32>
    %63 = arith.mulf %61, %62 : vector<8x1xf32>
    %cst_29 = arith.constant 2.000000e+00 : f32
    %64 = vector.broadcast %cst_29 : f32 to vector<8x1xf32>
    %65 = arith.subf %64, %63 : vector<8x1xf32>
    %66 = arith.mulf %62, %65 : vector<8x1xf32>
    %cst_30 = arith.constant dense<0.000000e+00> : vector<8x8xf32>
    %67 = tpu.matmul %59, %51, %cst_30 {dimension_numbers = #tpu.dot_dimension_numbers<[1], [0], [0], [1], [0, 0, 1, 1], [], []>} : vector<8x8xf32>, vector<8x8xf32>, vector<8x8xf32> -> vector<8x8xf32>
    %68 = vector.broadcast %66 : vector<8x1xf32> to vector<8x8xf32>
    %69 = arith.mulf %67, %68 : vector<8x8xf32>
    %c0_31 = arith.constant 0 : index
    %c8 = arith.constant 8 : index
    %70 = vector.load %arg17[%c0_31, %c8] : memref<8x32xf32, #tpu.memory_space<vmem>>, vector<8x8xf32>
    tpu.vector_store %arg17[%c0_31, %c8], %69 {strides = array<i32>} : memref<8x32xf32, #tpu.memory_space<vmem>>, vector<8x8xf32>,
    %71 = vector.extract_strided_slice %16 {offsets = [0, 16], sizes = [8, 8], strides = [1, 1]} : vector<8x32xf32> to vector<8x8xf32>
    %72 = vector.extract_strided_slice %19 {offsets = [0, 16], sizes = [8, 8], strides = [1, 1]} : vector<8x32xf32> to vector<8x8xf32>
    %73 = vector.extract_strided_slice %22 {offsets = [0, 16], sizes = [8, 8], strides = [1, 1]} : vector<8x32xf32> to vector<8x8xf32>
    "tpu.trace_start"() <{level = 10 : i32, message = "qd,kd->qk"}> : () -> ()
    %cst_32 = arith.constant dense<0.000000e+00> : vector<8x8xf32>
    %74 = tpu.matmul %71, %72, %cst_32 {dimension_numbers = #tpu.dot_dimension_numbers<[1], [1], [0], [0], [0, 0, 1, 0], [], []>} : vector<8x8xf32>, vector<8x8xf32>, vector<8x8xf32> -> vector<8x8xf32>
    %cst_33 = arith.constant -3.40282347E+38 : f32
    "tpu.trace_stop"() : () -> ()
    %75 = vector.broadcast %cst_33 : f32 to vector<8x8xf32>
    %76 = arith.select %26, %74, %75 : vector<8x8xi1>, vector<8x8xf32>
    %cst_34 = arith.constant dense<0xFF800000> : vector<8xf32>
    %77 = vector.multi_reduction <maximumf>, %76, %cst_34 [1] : vector<8x8xf32> to vector<8xf32>
    %78 = vector.shape_cast %77 : vector<8xf32> to vector<8x1xf32>
    %79 = vector.broadcast %78 : vector<8x1xf32> to vector<8x8xf32>
    %80 = arith.subf %76, %79 : vector<8x8xf32>
    %81 = math.exp %80 : vector<8x8xf32>
    %cst_35 = arith.constant dense<0.000000e+00> : vector<8xf32>
    %82 = vector.multi_reduction <add>, %81, %cst_35 [1] : vector<8x8xf32> to vector<8xf32>
    %83 = vector.shape_cast %82 : vector<8xf32> to vector<8x1xf32>
    %84 = tpu.reciprocal %83 {approx = true} : vector<8x1xf32> -> vector<8x1xf32>
    %85 = arith.mulf %83, %84 : vector<8x1xf32>
    %cst_36 = arith.constant 2.000000e+00 : f32
    %86 = vector.broadcast %cst_36 : f32 to vector<8x1xf32>
    %87 = arith.subf %86, %85 : vector<8x1xf32>
    %88 = arith.mulf %84, %87 : vector<8x1xf32>
    %cst_37 = arith.constant dense<0.000000e+00> : vector<8x8xf32>
    %89 = tpu.matmul %81, %73, %cst_37 {dimension_numbers = #tpu.dot_dimension_numbers<[1], [0], [0], [1], [0, 0, 1, 1], [], []>} : vector<8x8xf32>, vector<8x8xf32>, vector<8x8xf32> -> vector<8x8xf32>
    %90 = vector.broadcast %88 : vector<8x1xf32> to vector<8x8xf32>
    %91 = arith.mulf %89, %90 : vector<8x8xf32>
    %c0_38 = arith.constant 0 : index
    %c16 = arith.constant 16 : index
    %92 = vector.load %arg17[%c0_38, %c16] : memref<8x32xf32, #tpu.memory_space<vmem>>, vector<8x8xf32>
    tpu.vector_store %arg17[%c0_38, %c16], %91 {strides = array<i32>} : memref<8x32xf32, #tpu.memory_space<vmem>>, vector<8x8xf32>,
    %93 = vector.extract_strided_slice %16 {offsets = [0, 24], sizes = [8, 8], strides = [1, 1]} : vector<8x32xf32> to vector<8x8xf32>
    %94 = vector.extract_strided_slice %19 {offsets = [0, 24], sizes = [8, 8], strides = [1, 1]} : vector<8x32xf32> to vector<8x8xf32>
    %95 = vector.extract_strided_slice %22 {offsets = [0, 24], sizes = [8, 8], strides = [1, 1]} : vector<8x32xf32> to vector<8x8xf32>
    "tpu.trace_start"() <{level = 10 : i32, message = "qd,kd->qk"}> : () -> ()
    %cst_39 = arith.constant dense<0.000000e+00> : vector<8x8xf32>
    %96 = tpu.matmul %93, %94, %cst_39 {dimension_numbers = #tpu.dot_dimension_numbers<[1], [1], [0], [0], [0, 0, 1, 0], [], []>} : vector<8x8xf32>, vector<8x8xf32>, vector<8x8xf32> -> vector<8x8xf32>
    %cst_40 = arith.constant -3.40282347E+38 : f32
    "tpu.trace_stop"() : () -> ()
    %97 = vector.broadcast %cst_40 : f32 to vector<8x8xf32>
    %98 = arith.select %26, %96, %97 : vector<8x8xi1>, vector<8x8xf32>
    %cst_41 = arith.constant dense<0xFF800000> : vector<8xf32>
    %99 = vector.multi_reduction <maximumf>, %98, %cst_41 [1] : vector<8x8xf32> to vector<8xf32>
    %100 = vector.shape_cast %99 : vector<8xf32> to vector<8x1xf32>
    %101 = vector.broadcast %100 : vector<8x1xf32> to vector<8x8xf32>
    %102 = arith.subf %98, %101 : vector<8x8xf32>
    %103 = math.exp %102 : vector<8x8xf32>
    %cst_42 = arith.constant dense<0.000000e+00> : vector<8xf32>
    %104 = vector.multi_reduction <add>, %103, %cst_42 [1] : vector<8x8xf32> to vector<8xf32>
    %105 = vector.shape_cast %104 : vector<8xf32> to vector<8x1xf32>
    %106 = tpu.reciprocal %105 {approx = true} : vector<8x1xf32> -> vector<8x1xf32>
    %107 = arith.mulf %105, %106 : vector<8x1xf32>
    %cst_43 = arith.constant 2.000000e+00 : f32
    %108 = vector.broadcast %cst_43 : f32 to vector<8x1xf32>
    %109 = arith.subf %108, %107 : vector<8x1xf32>
    %110 = arith.mulf %106, %109 : vector<8x1xf32>
    %cst_44 = arith.constant dense<0.000000e+00> : vector<8x8xf32>
    %111 = tpu.matmul %103, %95, %cst_44 {dimension_numbers = #tpu.dot_dimension_numbers<[1], [0], [0], [1], [0, 0, 1, 1], [], []>} : vector<8x8xf32>, vector<8x8xf32>, vector<8x8xf32> -> vector<8x8xf32>
    %112 = vector.broadcast %110 : vector<8x1xf32> to vector<8x8xf32>
    %113 = arith.mulf %111, %112 : vector<8x8xf32>
    %c0_45 = arith.constant 0 : index
    %c24 = arith.constant 24 : index
    %114 = vector.load %arg17[%c0_45, %c24] : memref<8x32xf32, #tpu.memory_space<vmem>>, vector<8x8xf32>
    tpu.vector_store %arg17[%c0_45, %c24], %113 {strides = array<i32>} : memref<8x32xf32, #tpu.memory_space<vmem>>, vector<8x8xf32>,
    %c0_46 = arith.constant 0 : index
    %c0_47 = arith.constant 0 : index
    %115 = vector.load %arg16[%c0_46, %c0_47] : memref<8x32xf32, #tpu.memory_space<vmem>>, vector<8x32xf32>
    %c0_48 = arith.constant 0 : index
    %c0_49 = arith.constant 0 : index
    %116 = vector.load %arg17[%c0_48, %c0_49] : memref<8x32xf32, #tpu.memory_space<vmem>>, vector<8x32xf32>
    %117 = arith.index_cast %arg2 : i32 to index
    %c0_50 = arith.constant 0 : index
    %c0_51 = arith.constant 0 : index
    %118 = vector.load %arg13[%117, %c0_50, %c0_51] : memref<1x32x32xf32, #tpu.memory_space<vmem>>, vector<1x32x32xf32>
    %119 = vector.shape_cast %118 : vector<1x32x32xf32> to vector<32x32xf32>
    %cst_52 = arith.constant dense<0.000000e+00> : vector<8x32xf32>
    %120 = tpu.matmul %116, %119, %cst_52 {dimension_numbers = #tpu.dot_dimension_numbers<[1], [0], [0], [1], [0, 0, 1, 1], [], []>} : vector<8x32xf32>, vector<32x32xf32>, vector<8x32xf32> -> vector<8x32xf32>
    %121 = arith.addf %115, %120 : vector<8x32xf32>
    %c0_53 = arith.constant 0 : index
    %c0_54 = arith.constant 0 : index
    %122 = vector.load %arg16[%c0_53, %c0_54] : memref<8x32xf32, #tpu.memory_space<vmem>>, vector<8x32xf32>
    tpu.vector_store %arg16[%c0_53, %c0_54], %121 {strides = array<i32>} : memref<8x32xf32, #tpu.memory_space<vmem>>, vector<8x32xf32>,
    %c0_i32_55 = arith.constant 0 : i32
    %123 = arith.cmpi eq, %arg2, %c0_i32_55 : i32
    %124 = arith.extui %123 : i1 to i32
    %c0_i32_56 = arith.constant 0 : i32
    %125 = arith.cmpi ne, %124, %c0_i32_56 : i32
    scf.if %125 {
      %c0_57 = arith.constant 0 : index
      %c0_58 = arith.constant 0 : index
      %126 = vector.load %arg16[%c0_57, %c0_58] : memref<8x32xf32, #tpu.memory_space<vmem>>, vector<8x32xf32>
      %c0_59 = arith.constant 0 : index
      %c0_60 = arith.constant 0 : index
      %127 = vector.load %arg14[%c0_59, %c0_60] : memref<1x32xf32, #tpu.memory_space<vmem>>, vector<1x32xf32>
      %128 = vector.broadcast %127 : vector<1x32xf32> to vector<8x32xf32>
      %129 = arith.addf %126, %128 : vector<8x32xf32>
      %c0_61 = arith.constant 0 : index
      %c0_62 = arith.constant 0 : index
      %c0_63 = arith.constant 0 : index
      %130 = vector.load %arg15[%c0_61, %c0_62, %c0_63] : memref<1x8x32xf32, #tpu.memory_space<vmem>>, vector<1x8x32xf32>
      %131 = vector.shape_cast %130 : vector<1x8x32xf32> to vector<8x32xf32>
      %132 = vector.shape_cast %129 : vector<8x32xf32> to vector<1x8x32xf32>
      tpu.vector_store %arg15[%c0_61, %c0_62, %c0_63], %132 {strides = array<i32>} : memref<1x8x32xf32, #tpu.memory_space<vmem>>, vector<1x8x32xf32>,
    } else {
    }
    return
  }
  func.func @transform_0(%arg0: i32, %arg1: i32, %arg2: i32) -> (i32, i32, i32) {
    %c0_i32 = arith.constant 0 : i32
    %c0_i32_0 = arith.constant 0 : i32
    return %arg0, %arg1, %c0_i32 : i32, i32, i32
  }
  func.func @transform_1(%arg0: i32, %arg1: i32, %arg2: i32) -> (i32, i32, i32) {
    %c0_i32 = arith.constant 0 : i32
    %c0_i32_0 = arith.constant 0 : i32
    %c0_i32_1 = arith.constant 0 : i32
    return %arg0, %c0_i32, %c0_i32_0 : i32, i32, i32
  }
  func.func @transform_2(%arg0: i32, %arg1: i32, %arg2: i32) -> (i32, i32, i32) {
    %c0_i32 = arith.constant 0 : i32
    %c0_i32_0 = arith.constant 0 : i32
    %c0_i32_1 = arith.constant 0 : i32
    return %arg0, %c0_i32, %c0_i32_0 : i32, i32, i32
  }
  func.func @transform_3(%arg0: i32, %arg1: i32, %arg2: i32) -> (i32, i32, i32) {
    %c0_i32 = arith.constant 0 : i32
    %c0_i32_0 = arith.constant 0 : i32
    return %arg0, %arg1, %c0_i32 : i32, i32, i32
  }
  func.func @transform_4(%arg0: i32, %arg1: i32, %arg2: i32) -> (i32, i32, i32) {
    %c0_i32 = arith.constant 0 : i32
    %c0_i32_0 = arith.constant 0 : i32
    %c0_i32_1 = arith.constant 0 : i32
    %c0_i32_2 = arith.constant 0 : i32
    return %c0_i32, %c0_i32_0, %c0_i32_1 : i32, i32, i32
  }
  func.func @transform_5(%arg0: i32, %arg1: i32, %arg2: i32) -> (i32, i32, i32) {
    %c0_i32 = arith.constant 0 : i32
    %c0_i32_0 = arith.constant 0 : i32
    %c0_i32_1 = arith.constant 0 : i32
    %c0_i32_2 = arith.constant 0 : i32
    return %c0_i32, %c0_i32_0, %c0_i32_1 : i32, i32, i32
  }
  func.func @transform_6(%arg0: i32, %arg1: i32, %arg2: i32) -> (i32, i32, i32) {
    %c0_i32 = arith.constant 0 : i32
    %c0_i32_0 = arith.constant 0 : i32
    %c0_i32_1 = arith.constant 0 : i32
    %c0_i32_2 = arith.constant 0 : i32
    return %c0_i32, %c0_i32_0, %c0_i32_1 : i32, i32, i32
  }
  func.func @transform_7(%arg0: i32, %arg1: i32, %arg2: i32) -> (i32, i32, i32) {
    %c0_i32 = arith.constant 0 : i32
    %c0_i32_0 = arith.constant 0 : i32
    %c0_i32_1 = arith.constant 0 : i32
    %c0_i32_2 = arith.constant 0 : i32
    return %c0_i32, %c0_i32_0, %c0_i32_1 : i32, i32, i32
  }
  func.func @transform_8(%arg0: i32, %arg1: i32, %arg2: i32) -> (i32, i32, i32) {
    %c0_i32 = arith.constant 0 : i32
    %c0_i32_0 = arith.constant 0 : i32
    %c0_i32_1 = arith.constant 0 : i32
    %c0_i32_2 = arith.constant 0 : i32
    return %c0_i32, %c0_i32_0, %c0_i32_1 : i32, i32, i32
  }
  func.func @transform_9(%arg0: i32, %arg1: i32, %arg2: i32) -> (i32, i32, i32) {
    %c0_i32 = arith.constant 0 : i32
    %c0_i32_0 = arith.constant 0 : i32
    %c0_i32_1 = arith.constant 0 : i32
    %c0_i32_2 = arith.constant 0 : i32
    return %c0_i32, %c0_i32_0, %c0_i32_1 : i32, i32, i32
  }
  func.func @transform_10(%arg0: i32, %arg1: i32, %arg2: i32) -> (i32, i32, i32) {
    %c0_i32 = arith.constant 0 : i32
    %c0_i32_0 = arith.constant 0 : i32
    %c0_i32_1 = arith.constant 0 : i32
    %c0_i32_2 = arith.constant 0 : i32
    return %c0_i32, %c0_i32_0, %c0_i32_1 : i32, i32, i32
  }
  func.func @transform_11(%arg0: i32, %arg1: i32, %arg2: i32) -> (i32, i32) {
    %c0_i32 = arith.constant 0 : i32
    %c0_i32_0 = arith.constant 0 : i32
    %c0_i32_1 = arith.constant 0 : i32
    return %c0_i32, %c0_i32_0 : i32, i32
  }
  func.func @transform_12(%arg0: i32, %arg1: i32, %arg2: i32) -> (i32, i32, i32) {
    %c0_i32 = arith.constant 0 : i32
    %c0_i32_0 = arith.constant 0 : i32
    return %arg0, %arg1, %c0_i32 : i32, i32, i32
  }
}

</mosaic_0001>

<llo_original>
// kernel: tpu_custom_call.1
$region0: #{tpu_custom_call.1}
  #allocation0 [shape = 'u32[]', space=smem, size = 0x4, offset = 0x4, fixed_abs, tag = 'smem constant byte address 0x4 - core index']
  #allocation1 [shape = 'u32[144,128]{1,0:T(1,128)}', space=vmem, size = 0x12000, scoped, tag = 'internal scratch']
  #allocation2 [shape = 'f32[8,32]{1,0:T(8,128)}', space=vmem, size = 0x1000, scoped, tag = 'scratch operand']
  #allocation3 [shape = 'f32[8,32]{1,0:T(8,128)}', space=vmem, size = 0x1000, scoped, tag = 'scratch operand']
  #allocation4 [shape = 'f32[1,8,32]{2,1,0:T(8,128)}', space=vmem, size = 0x1000, scoped, tag = 'scratch operand']
  #allocation5 [shape = 'f32[1,8,32]{2,1,0:T(8,128)}', space=vmem, size = 0x1000, scoped, tag = 'scratch operand']
  %s0 = inlined_call_operand.hbm [shape: f32[2,8,32], index: 0, kind: input, shape index: {}]
  %s1 = inlined_call_operand.hbm [shape: f32[2,8,32], index: 1, kind: input, shape index: {}]
  %s2 = inlined_call_operand.hbm [shape: f32[2,8,32], index: 2, kind: input, shape index: {}]
  %s3 = inlined_call_operand.hbm [shape: f32[2,8,8], index: 3, kind: input, shape index: {}]
  %s4 = inlined_call_operand.hbm [shape: f32[1,32,32], index: 4, kind: input, shape index: {}]
  %s5 = inlined_call_operand.vmem [shape: f32[1,1,32], index: 5, kind: input, shape index: {}]
  %s6 = inlined_call_operand.hbm [shape: f32[1,32,32], index: 6, kind: input, shape index: {}]
  %s7 = inlined_call_operand.vmem [shape: f32[1,1,32], index: 7, kind: input, shape index: {}]
  %s8 = inlined_call_operand.hbm [shape: f32[1,32,32], index: 8, kind: input, shape index: {}]
  %s9 = inlined_call_operand.vmem [shape: f32[1,1,32], index: 9, kind: input, shape index: {}]
  %s10 = inlined_call_operand.hbm [shape: f32[1,32,32], index: 10, kind: input, shape index: {}]
  %s11 = inlined_call_operand.vmem [shape: f32[1,32], index: 11, kind: input, shape index: {}]
  %s12 = inlined_call_operand.hbm [shape: f32[2,8,32], index: 12, kind: output, shape index: {}]
  %s13 = sld [smem:[#allocation0]]
  $region125: #{tpu_custom_call.1} parent=0
    _
  %s15 = ssub.s32 1, %s13
  %s16 = scalar_select 0, %s15, %s13
  $region1: #{tpu_custom_call.1} parent=0
    #allocation6 [shape = 'u8[8192]{0}', space=vmem, size = 0x2000, scoped, tag = 'input window, operand 0']
    #allocation7 [shape = 's32[2]{0}', space=sflag, size = 0x8, scoped, tag = 'scoped memory for tpu_custom_call.1']
    #allocation8 [shape = 's32[2]{0}', space=sflag, size = 0x8, scoped, tag = 'scoped memory for tpu_custom_call.1']
    #allocation9 [shape = 'u8[8192]{0}', space=vmem, size = 0x2000, scoped, tag = 'input window, operand 1']
    #allocation10 [shape = 's32[2]{0}', space=sflag, size = 0x8, scoped, tag = 'scoped memory for tpu_custom_call.1']
    #allocation11 [shape = 'u8[8192]{0}', space=vmem, size = 0x2000, scoped, tag = 'input window, operand 2']
    #allocation12 [shape = 'u8[8192]{0}', space=vmem, size = 0x2000, scoped, tag = 'input window, operand 3']
    #allocation13 [shape = 's32[2]{0}', space=sflag, size = 0x8, scoped, tag = 'scoped memory for tpu_custom_call.1']
    #allocation14 [shape = 'u8[16384]{0}', space=vmem, size = 0x4000, scoped, tag = 'input window, operand 4, single buffered']
    #allocation15 [shape = 'u8[16384]{0}', space=vmem, size = 0x4000, scoped, tag = 'input window, operand 6, single buffered']
    #allocation16 [shape = 's32[1]{0}', space=sflag, size = 0x4, scoped, tag = 'scoped memory for tpu_custom_call.1']
    #allocation17 [shape = 'u8[16384]{0}', space=vmem, size = 0x4000, scoped, tag = 'input window, operand 8, single buffered']
    #allocation18 [shape = 'u8[16384]{0}', space=vmem, size = 0x4000, scoped, tag = 'input window, operand 10, single buffered']
    #allocation19 [shape = 's32[1]{0}', space=sflag, size = 0x4, scoped, tag = 'scoped memory for tpu_custom_call.1']
    #allocation20 [shape = 'u8[8192]{0}', space=vmem, size = 0x2000, scoped, tag = 'output window, operand 0']
    %17 = vsyncpa [#allocation7], 0
    %s18 = scalar_lea.sflag [#allocation7], 1
    %19 = vsyncpa %s18, 0
    %20 = vsyncpa [#allocation10], 0
    %s21 = scalar_lea.sflag [#allocation10], 1
    %22 = vsyncpa %s21, 0
    %23 = vsyncpa [#allocation13], 0
    %s24 = scalar_lea.sflag [#allocation13], 1
    %25 = vsyncpa %s24, 0
    %26 = vsyncpa [#allocation16], 0
    %27 = vsyncpa [#allocation19], 0
    %28 = vsyncpa [#allocation8], 0
    %s29 = scalar_lea.sflag [#allocation8], 1
    %30 = vsyncpa %s29, 0
    loop: start=0, step=1, limit=4
    $region2: #{tpu_custom_call.1} parent=1 // loop_pre_header
      _
    $region3: #{tpu_custom_call.1} parent=1 // loop_header
      %s32 = sphi 0, %s36
      %p33 = scmp.ge.s32.totalorder %s32, 4
      %s39 = sphi 0, %s58
      %s40 = sphi 0, %s54
      %s41 = sphi 0, %s50
      %s42 = sphi 0, %s39
      %s43 = sphi 0, %s40
      %s44 = sphi 0, %s41
      %s45 = sphi 0, %s42
      %s46 = sphi 0, %s43
      %s47 = sphi 0, %s44
      %s63 = sphi 0, %s65
      %s66 = sphi 0, %s63
      %s67 = sphi 0, %s66
      %s83 = sphi 0, %s67
      %s89 = sphi 0, %s91
      %s92 = sphi 0, %s89
      %s93 = sphi 0, %s92
      %s109 = sphi 0, %s93
      %s115 = sphi 0, %s117
      %s118 = sphi 0, %s115
      %s119 = sphi 0, %s118
      %s135 = sphi 0, %s119
      %s143 = sphi 0, %s145
      %s146 = sphi 0, %s143
      %s147 = sphi 0, %s146
      %s163 = sphi 0, %s147
      %s167 = sphi 0, %s167
      %s169 = sphi 0, %s167
      %s170 = sphi 0, %s169
      %s184 = sphi 0, %s170
      %s188 = sphi 0, %s188
      %s190 = sphi 0, %s188
      %s191 = sphi 0, %s190
      %s205 = sphi 0, %s191
      %s209 = sphi 0, %s209
      %s211 = sphi 0, %s209
      %s212 = sphi 0, %s211
      %s226 = sphi 0, %s212
      %s230 = sphi 0, %s230
      %s232 = sphi 0, %s230
      %s233 = sphi 0, %s232
      %s247 = sphi 0, %s233
      %s251 = sphi 0, %s251
      %s253 = sphi 0, %s251
      %s254 = sphi 0, %s253
      %s268 = sphi 0, %s254
      %s272 = sphi 0, %s272
      %s274 = sphi 0, %s272
      %s275 = sphi 0, %s274
      %s289 = sphi 0, %s275
      %s293 = sphi 0, %s293
      %s295 = sphi 0, %s293
      %s296 = sphi 0, %s295
      %s310 = sphi 0, %s296
      %s314 = sphi 0, %s314
      %s316 = sphi 0, %s314
      %s317 = sphi 0, %s316
      %s331 = sphi 0, %s317
      %s339 = sphi 0, %s341
      %s342 = sphi 0, %s339
      %s343 = sphi 0, %s342
      %s359 = sphi 0, %s343
    $region4: #{tpu_custom_call.1} parent=1 // loop_header_branch
      %35 = sbr.rel (%p33) target = $region8
    $region5: #{tpu_custom_call.1} parent=1 // loop_body
      %s37 = ssub.s32 %s32, 1
      %s38 = ssub.s32 %s32, 2
      %s48 = sadd.s32 1, %s41
      %p49 = scmp.ge.s32.totalorder %s48, 1
      %s50 = scalar_select %p49, 0, %s48
      %s51 = sadd.s32 1, %s40
      %s52 = scalar_select %p49, %s51, %s40
      %p53 = scmp.ge.s32.totalorder %s52, 1
      %s54 = scalar_select %p53, 0, %s52
      %s55 = sadd.s32 1, %s39
      %s56 = scalar_select %p53, %s55, %s39
      %p57 = scmp.ge.s32.totalorder %s56, 2
      %s58 = scalar_select %p57, 0, %s56
      %s59 = ssub.s32 %s39, %s58
      %s60 = ssub.s32 %s40, %s54
      %s61 = sor.u32 %s59, %s60
      %p62 = scmp.eq.s32.totalorder %s61, 0
      %s64 = sadd.s32 %s63, 1
      %s65 = scalar_select %p62, %s63, %s64
      %p68 = pneg %p62
      %p69 = scmp.eq.s32.totalorder %s32, 1
      %p70 = por %p68, %p69
      %p71 = scmp.ne.s32.totalorder %s63, %s66
      %p72 = scmp.eq.s32.totalorder %s32, 0
      %p73 = por %p71, %p72
      %p74 = scmp.ne.s32.totalorder %s63, %s66
      %p75 = scmp.eq.s32.totalorder %s37, 1
      %p76 = por %p74, %p75
      %p77 = scmp.ne.s32.totalorder %s66, %s67
      %p78 = scmp.eq.s32.totalorder %s37, 0
      %p79 = por %p77, %p78
      %p80 = scmp.ne.s32.totalorder %s66, %s67
      %p81 = scmp.eq.s32.totalorder %s38, 1
      %p82 = por %p80, %p81
      %p84 = scmp.ne.s32.totalorder %s67, %s83
      %p85 = scmp.eq.s32.totalorder %s38, 0
      %p86 = por %p84, %p85
      %s87 = ssub.s32 %s39, %s58
      %p88 = scmp.eq.s32.totalorder %s87, 0
      %s90 = sadd.s32 %s89, 1
      %s91 = scalar_select %p88, %s89, %s90
      %p94 = pneg %p88
      %p95 = scmp.eq.s32.totalorder %s32, 1
      %p96 = por %p94, %p95
      %p97 = scmp.ne.s32.totalorder %s89, %s92
      %p98 = scmp.eq.s32.totalorder %s32, 0
      %p99 = por %p97, %p98
      %p100 = scmp.ne.s32.totalorder %s89, %s92
      %p101 = scmp.eq.s32.totalorder %s37, 1
      %p102 = por %p100, %p101
      %p103 = scmp.ne.s32.totalorder %s92, %s93
      %p104 = scmp.eq.s32.totalorder %s37, 0
      %p105 = por %p103, %p104
      %p106 = scmp.ne.s32.totalorder %s92, %s93
      %p107 = scmp.eq.s32.totalorder %s38, 1
      %p108 = por %p106, %p107
      %p110 = scmp.ne.s32.totalorder %s93, %s109
      %p111 = scmp.eq.s32.totalorder %s38, 0
      %p112 = por %p110, %p111
      %s113 = ssub.s32 %s39, %s58
      %p114 = scmp.eq.s32.totalorder %s113, 0
      %s116 = sadd.s32 %s115, 1
      %s117 = scalar_select %p114, %s115, %s116
      %p120 = pneg %p114
      %p121 = scmp.eq.s32.totalorder %s32, 1
      %p122 = por %p120, %p121
      %p123 = scmp.ne.s32.totalorder %s115, %s118
      %p124 = scmp.eq.s32.totalorder %s32, 0
      %p125 = por %p123, %p124
      %p126 = scmp.ne.s32.totalorder %s115, %s118
      %p127 = scmp.eq.s32.totalorder %s37, 1
      %p128 = por %p126, %p127
      %p129 = scmp.ne.s32.totalorder %s118, %s119
      %p130 = scmp.eq.s32.totalorder %s37, 0
      %p131 = por %p129, %p130
      %p132 = scmp.ne.s32.totalorder %s118, %s119
      %p133 = scmp.eq.s32.totalorder %s38, 1
      %p134 = por %p132, %p133
      %p136 = scmp.ne.s32.totalorder %s119, %s135
      %p137 = scmp.eq.s32.totalorder %s38, 0
      %p138 = por %p136, %p137
      %s139 = ssub.s32 %s39, %s58
      %s140 = ssub.s32 %s40, %s54
      %s141 = sor.u32 %s139, %s140
      %p142 = scmp.eq.s32.totalorder %s141, 0
      %s144 = sadd.s32 %s143, 1
      %s145 = scalar_select %p142, %s143, %s144
      %p148 = pneg %p142
      %p149 = scmp.eq.s32.totalorder %s32, 1
      %p150 = por %p148, %p149
      %p151 = scmp.ne.s32.totalorder %s143, %s146
      %p152 = scmp.eq.s32.totalorder %s32, 0
      %p153 = por %p151, %p152
      %p154 = scmp.ne.s32.totalorder %s143, %s146
      %p155 = scmp.eq.s32.totalorder %s37, 1
      %p156 = por %p154, %p155
      %p157 = scmp.ne.s32.totalorder %s146, %s147
      %p158 = scmp.eq.s32.totalorder %s37, 0
      %p159 = por %p157, %p158
      %p160 = scmp.ne.s32.totalorder %s146, %s147
      %p161 = scmp.eq.s32.totalorder %s38, 1
      %p162 = por %p160, %p161
      %p164 = scmp.ne.s32.totalorder %s147, %s163
      %p165 = scmp.eq.s32.totalorder %s38, 0
      %p166 = por %p164, %p165
      %s168 = sadd.s32 %s167, 1
      %p171 = scmp.eq.s32.totalorder %s32, 1
      %p172 = scmp.ne.s32.totalorder %s167, %s169
      %p173 = scmp.eq.s32.totalorder %s32, 0
      %p174 = por %p172, %p173
      %p175 = scmp.ne.s32.totalorder %s167, %s169
      %p176 = scmp.eq.s32.totalorder %s37, 1
      %p177 = por %p175, %p176
      %p178 = scmp.ne.s32.totalorder %s169, %s170
      %p179 = scmp.eq.s32.totalorder %s37, 0
      %p180 = por %p178, %p179
      %p181 = scmp.ne.s32.totalorder %s169, %s170
      %p182 = scmp.eq.s32.totalorder %s38, 1
      %p183 = por %p181, %p182
      %p185 = scmp.ne.s32.totalorder %s170, %s184
      %p186 = scmp.eq.s32.totalorder %s38, 0
      %p187 = por %p185, %p186
      %s189 = sadd.s32 %s188, 1
      %p192 = scmp.eq.s32.totalorder %s32, 1
      %p193 = scmp.ne.s32.totalorder %s188, %s190
      %p194 = scmp.eq.s32.totalorder %s32, 0
      %p195 = por %p193, %p194
      %p196 = scmp.ne.s32.totalorder %s188, %s190
      %p197 = scmp.eq.s32.totalorder %s37, 1
      %p198 = por %p196, %p197
      %p199 = scmp.ne.s32.totalorder %s190, %s191
      %p200 = scmp.eq.s32.totalorder %s37, 0
      %p201 = por %p199, %p200
      %p202 = scmp.ne.s32.totalorder %s190, %s191
      %p203 = scmp.eq.s32.totalorder %s38, 1
      %p204 = por %p202, %p203
      %p206 = scmp.ne.s32.totalorder %s191, %s205
      %p207 = scmp.eq.s32.totalorder %s38, 0
      %p208 = por %p206, %p207
      %s210 = sadd.s32 %s209, 1
      %p213 = scmp.eq.s32.totalorder %s32, 1
      %p214 = scmp.ne.s32.totalorder %s209, %s211
      %p215 = scmp.eq.s32.totalorder %s32, 0
      %p216 = por %p214, %p215
      %p217 = scmp.ne.s32.totalorder %s209, %s211
      %p218 = scmp.eq.s32.totalorder %s37, 1
      %p219 = por %p217, %p218
      %p220 = scmp.ne.s32.totalorder %s211, %s212
      %p221 = scmp.eq.s32.totalorder %s37, 0
      %p222 = por %p220, %p221
      %p223 = scmp.ne.s32.totalorder %s211, %s212
      %p224 = scmp.eq.s32.totalorder %s38, 1
      %p225 = por %p223, %p224
      %p227 = scmp.ne.s32.totalorder %s212, %s226
      %p228 = scmp.eq.s32.totalorder %s38, 0
      %p229 = por %p227, %p228
      %s231 = sadd.s32 %s230, 1
      %p234 = scmp.eq.s32.totalorder %s32, 1
      %p235 = scmp.ne.s32.totalorder %s230, %s232
      %p236 = scmp.eq.s32.totalorder %s32, 0
      %p237 = por %p235, %p236
      %p238 = scmp.ne.s32.totalorder %s230, %s232
      %p239 = scmp.eq.s32.totalorder %s37, 1
      %p240 = por %p238, %p239
      %p241 = scmp.ne.s32.totalorder %s232, %s233
      %p242 = scmp.eq.s32.totalorder %s37, 0
      %p243 = por %p241, %p242
      %p244 = scmp.ne.s32.totalorder %s232, %s233
      %p245 = scmp.eq.s32.totalorder %s38, 1
      %p246 = por %p244, %p245
      %p248 = scmp.ne.s32.totalorder %s233, %s247
      %p249 = scmp.eq.s32.totalorder %s38, 0
      %p250 = por %p248, %p249
      %s252 = sadd.s32 %s251, 1
      %p255 = scmp.eq.s32.totalorder %s32, 1
      %p256 = scmp.ne.s32.totalorder %s251, %s253
      %p257 = scmp.eq.s32.totalorder %s32, 0
      %p258 = por %p256, %p257
      %p259 = scmp.ne.s32.totalorder %s251, %s253
      %p260 = scmp.eq.s32.totalorder %s37, 1
      %p261 = por %p259, %p260
      %p262 = scmp.ne.s32.totalorder %s253, %s254
      %p263 = scmp.eq.s32.totalorder %s37, 0
      %p264 = por %p262, %p263
      %p265 = scmp.ne.s32.totalorder %s253, %s254
      %p266 = scmp.eq.s32.totalorder %s38, 1
      %p267 = por %p265, %p266
      %p269 = scmp.ne.s32.totalorder %s254, %s268
      %p270 = scmp.eq.s32.totalorder %s38, 0
      %p271 = por %p269, %p270
      %s273 = sadd.s32 %s272, 1
      %p276 = scmp.eq.s32.totalorder %s32, 1
      %p277 = scmp.ne.s32.totalorder %s272, %s274
      %p278 = scmp.eq.s32.totalorder %s32, 0
      %p279 = por %p277, %p278
      %p280 = scmp.ne.s32.totalorder %s272, %s274
      %p281 = scmp.eq.s32.totalorder %s37, 1
      %p282 = por %p280, %p281
      %p283 = scmp.ne.s32.totalorder %s274, %s275
      %p284 = scmp.eq.s32.totalorder %s37, 0
      %p285 = por %p283, %p284
      %p286 = scmp.ne.s32.totalorder %s274, %s275
      %p287 = scmp.eq.s32.totalorder %s38, 1
      %p288 = por %p286, %p287
      %p290 = scmp.ne.s32.totalorder %s275, %s289
      %p291 = scmp.eq.s32.totalorder %s38, 0
      %p292 = por %p290, %p291
      %s294 = sadd.s32 %s293, 1
      %p297 = scmp.eq.s32.totalorder %s32, 1
      %p298 = scmp.ne.s32.totalorder %s293, %s295
      %p299 = scmp.eq.s32.totalorder %s32, 0
      %p300 = por %p298, %p299
      %p301 = scmp.ne.s32.totalorder %s293, %s295
      %p302 = scmp.eq.s32.totalorder %s37, 1
      %p303 = por %p301, %p302
      %p304 = scmp.ne.s32.totalorder %s295, %s296
      %p305 = scmp.eq.s32.totalorder %s37, 0
      %p306 = por %p304, %p305
      %p307 = scmp.ne.s32.totalorder %s295, %s296
      %p308 = scmp.eq.s32.totalorder %s38, 1
      %p309 = por %p307, %p308
      %p311 = scmp.ne.s32.totalorder %s296, %s310
      %p312 = scmp.eq.s32.totalorder %s38, 0
      %p313 = por %p311, %p312
      %s315 = sadd.s32 %s314, 1
      %p318 = scmp.eq.s32.totalorder %s32, 1
      %p319 = scmp.ne.s32.totalorder %s314, %s316
      %p320 = scmp.eq.s32.totalorder %s32, 0
      %p321 = por %p319, %p320
      %p322 = scmp.ne.s32.totalorder %s314, %s316
      %p323 = scmp.eq.s32.totalorder %s37, 1
      %p324 = por %p322, %p323
      %p325 = scmp.ne.s32.totalorder %s316, %s317
      %p326 = scmp.eq.s32.totalorder %s37, 0
      %p327 = por %p325, %p326
      %p328 = scmp.ne.s32.totalorder %s316, %s317
      %p329 = scmp.eq.s32.totalorder %s38, 1
      %p330 = por %p328, %p329
      %p332 = scmp.ne.s32.totalorder %s317, %s331
      %p333 = scmp.eq.s32.totalorder %s38, 0
      %p334 = por %p332, %p333
      %s335 = ssub.s32 %s39, %s58
      %s336 = ssub.s32 %s40, %s54
      %s337 = sor.u32 %s335, %s336
      %p338 = scmp.eq.s32.totalorder %s337, 0
      %s340 = sadd.s32 %s339, 1
      %s341 = scalar_select %p338, %s339, %s340
      %p344 = pneg %p338
      %p345 = scmp.eq.s32.totalorder %s32, 1
      %p346 = por %p344, %p345
      %p347 = scmp.ne.s32.totalorder %s339, %s342
      %p348 = scmp.eq.s32.totalorder %s32, 0
      %p349 = por %p347, %p348
      %p350 = scmp.ne.s32.totalorder %s339, %s342
      %p351 = scmp.eq.s32.totalorder %s37, 1
      %p352 = por %p350, %p351
      %p353 = scmp.ne.s32.totalorder %s342, %s343
      %p354 = scmp.eq.s32.totalorder %s37, 0
      %p355 = por %p353, %p354
      %p356 = scmp.ne.s32.totalorder %s342, %s343
      %p357 = scmp.eq.s32.totalorder %s38, 1
      %p358 = por %p356, %p357
      %p360 = scmp.ne.s32.totalorder %s343, %s359
      %p361 = scmp.eq.s32.totalorder %s38, 0
      %p362 = por %p360, %p361
      %p363 = scmp.le.s32.totalorder 1, %s32
      %p364 = scmp.lt.s32.totalorder %s32, 3
      %p365 = pnand %p363, %p364
      %p366 = pneg %p365
      // Predicated region
      $region9: #{tpu_custom_call.1} parent=5 // pred_check
        _
      $region10: #{tpu_custom_call.1} parent=5 // pred_check_branch
        %368 = sbr.rel (%p365) target = $region12
      $region11: #{tpu_custom_call.1} parent=5 // pred_region
        %s369 = ssub.s32 %s32, 1
        // Predicated region
        $region13: #{tpu_custom_call.1} parent=11 // pred_check
          %p370 = pneg %p180
        $region14: #{tpu_custom_call.1} parent=11 // pred_check_branch
          %372 = sbr.rel (%p370) target = $region16
        $region15: #{tpu_custom_call.1} parent=11 // pred_region
          %s374 = ssub.s32 512, 512
          %375 = vsyncadd [#allocation13], %s374
          %s376 = sshll.u32 [#allocation14], 4
          %s377 = int_to_ptr.vmem [resolvable:$true] %s376
          %382 = dma.hbm_to_vmem [thread:$0]  %s4, 512, %s377, [#allocation13], 128, 128, 8
        $region16: #{tpu_custom_call.1} parent=11 // pred_fallthru
          _
        // Predicated region
        $region17: #{tpu_custom_call.1} parent=11 // pred_check
          %p383 = pneg %p201
        $region18: #{tpu_custom_call.1} parent=11 // pred_check_branch
          %385 = sbr.rel (%p383) target = $region20
        $region19: #{tpu_custom_call.1} parent=11 // pred_region
          _
        $region20: #{tpu_custom_call.1} parent=11 // pred_fallthru
          _
        // Predicated region
        $region21: #{tpu_custom_call.1} parent=11 // pred_check
          %p386 = pneg %p222
        $region22: #{tpu_custom_call.1} parent=11 // pred_check_branch
          %388 = sbr.rel (%p386) target = $region24
        $region23: #{tpu_custom_call.1} parent=11 // pred_region
          %s390 = ssub.s32 512, 512
          %391 = vsyncadd [#allocation16], %s390
          %s392 = sshll.u32 [#allocation15], 4
          %s393 = int_to_ptr.vmem [resolvable:$true] %s392
          %398 = dma.hbm_to_vmem [thread:$0]  %s6, 512, %s393, [#allocation16], 128, 128, 8
        $region24: #{tpu_custom_call.1} parent=11 // pred_fallthru
          _
        // Predicated region
        $region25: #{tpu_custom_call.1} parent=11 // pred_check
          %p399 = pneg %p243
        $region26: #{tpu_custom_call.1} parent=11 // pred_check_branch
          %401 = sbr.rel (%p399) target = $region28
        $region27: #{tpu_custom_call.1} parent=11 // pred_region
          _
        $region28: #{tpu_custom_call.1} parent=11 // pred_fallthru
          _
        // Predicated region
        $region29: #{tpu_custom_call.1} parent=11 // pred_check
          %p402 = pneg %p264
        $region30: #{tpu_custom_call.1} parent=11 // pred_check_branch
          %404 = sbr.rel (%p402) target = $region32
        $region31: #{tpu_custom_call.1} parent=11 // pred_region
          %s406 = ssub.s32 512, 512
          %407 = vsyncadd [#allocation16], %s406
          %s408 = sshll.u32 [#allocation17], 4
          %s409 = int_to_ptr.vmem [resolvable:$true] %s408
          %414 = dma.hbm_to_vmem [thread:$0]  %s8, 512, %s409, [#allocation16], 128, 128, 8
        $region32: #{tpu_custom_call.1} parent=11 // pred_fallthru
          _
        // Predicated region
        $region33: #{tpu_custom_call.1} parent=11 // pred_check
          %p415 = pneg %p285
        $region34: #{tpu_custom_call.1} parent=11 // pred_check_branch
          %417 = sbr.rel (%p415) target = $region36
        $region35: #{tpu_custom_call.1} parent=11 // pred_region
          _
        $region36: #{tpu_custom_call.1} parent=11 // pred_fallthru
          _
        // Predicated region
        $region37: #{tpu_custom_call.1} parent=11 // pred_check
          %p418 = pneg %p306
        $region38: #{tpu_custom_call.1} parent=11 // pred_check_branch
          %420 = sbr.rel (%p418) target = $region40
        $region39: #{tpu_custom_call.1} parent=11 // pred_region
          %s422 = ssub.s32 512, 512
          %423 = vsyncadd [#allocation19], %s422
          %s424 = sshll.u32 [#allocation18], 4
          %s425 = int_to_ptr.vmem [resolvable:$true] %s424
          %430 = dma.hbm_to_vmem [thread:$0]  %s10, 512, %s425, [#allocation19], 128, 128, 8
        $region40: #{tpu_custom_call.1} parent=11 // pred_fallthru
          _
        // Predicated region
        $region41: #{tpu_custom_call.1} parent=11 // pred_check
          %p431 = pneg %p327
        $region42: #{tpu_custom_call.1} parent=11 // pred_check_branch
          %433 = sbr.rel (%p431) target = $region44
        $region43: #{tpu_custom_call.1} parent=11 // pred_region
          _
        $region44: #{tpu_custom_call.1} parent=11 // pred_fallthru
          _
      $region12: #{tpu_custom_call.1} parent=5 // pred_fallthru
        _
      %p434 = scmp.lt.s32.totalorder %s32, 2
      // Predicated region
      $region45: #{tpu_custom_call.1} parent=5 // pred_check
        %p435 = pneg %p434
      $region46: #{tpu_custom_call.1} parent=5 // pred_check_branch
        %437 = sbr.rel (%p435) target = $region48
      $region47: #{tpu_custom_call.1} parent=5 // pred_region
        // Predicated region
        $region49: #{tpu_custom_call.1} parent=47 // pred_check
          %p438 = pneg %p73
        $region50: #{tpu_custom_call.1} parent=47 // pred_check_branch
          %440 = sbr.rel (%p438) target = $region52
        $region51: #{tpu_custom_call.1} parent=47 // pred_region
          %s441 = sand.u32 %s63, 1
          %s442 = scalar_lea.sflag [#allocation7], %s441
          %s443 = sand.u32 %s63, 1
          %s444 = smul.addr %s443, 8
          %s445 = scalar_lea.vmem [#allocation6], %s444
          %s447 = ssub.s32 128, 128
          %448 = vsyncadd %s442, %s447
          %s449 = sadd.s32 %s40, %s39
          %s450 = smul.addr %s449, 128
          %s451 = scalar_lea.hbm %s0, %s450
          %s453 = sshll.u32 %s445, 4
          %s454 = int_to_ptr.vmem [resolvable:$true] %s453
          %456 = dma.hbm_to_vmem [thread:$0]  %s451, 128, %s454, %s442
        $region52: #{tpu_custom_call.1} parent=47 // pred_fallthru
          _
        // Predicated region
        $region53: #{tpu_custom_call.1} parent=47 // pred_check
          %p457 = pneg %p99
        $region54: #{tpu_custom_call.1} parent=47 // pred_check_branch
          %459 = sbr.rel (%p457) target = $region56
        $region55: #{tpu_custom_call.1} parent=47 // pred_region
          %s460 = sand.u32 %s32, 1
          %s461 = scalar_lea.sflag [#allocation10], %s460
          %s462 = sand.u32 %s89, 1
          %s463 = smul.addr %s462, 8
          %s464 = scalar_lea.vmem [#allocation9], %s463
          %s466 = ssub.s32 128, 128
          %467 = vsyncadd %s461, %s466
          %s468 = smul.addr %s39, 128
          %s469 = scalar_lea.hbm %s1, %s468
          %s471 = sshll.u32 %s464, 4
          %s472 = int_to_ptr.vmem [resolvable:$true] %s471
          %474 = dma.hbm_to_vmem [thread:$0]  %s469, 128, %s472, %s461
        $region56: #{tpu_custom_call.1} parent=47 // pred_fallthru
          _
        // Predicated region
        $region57: #{tpu_custom_call.1} parent=47 // pred_check
          %p475 = pneg %p125
        $region58: #{tpu_custom_call.1} parent=47 // pred_check_branch
          %477 = sbr.rel (%p475) target = $region60
        $region59: #{tpu_custom_call.1} parent=47 // pred_region
          %s478 = sand.u32 %s32, 1
          %s479 = scalar_lea.sflag [#allocation10], %s478
          %s480 = sand.u32 %s115, 1
          %s481 = smul.addr %s480, 8
          %s482 = scalar_lea.vmem [#allocation11], %s481
          %s484 = ssub.s32 128, 128
          %485 = vsyncadd %s479, %s484
          %s486 = smul.addr %s39, 128
          %s487 = scalar_lea.hbm %s2, %s486
          %s489 = sshll.u32 %s482, 4
          %s490 = int_to_ptr.vmem [resolvable:$true] %s489
          %492 = dma.hbm_to_vmem [thread:$0]  %s487, 128, %s490, %s479
        $region60: #{tpu_custom_call.1} parent=47 // pred_fallthru
          _
        // Predicated region
        $region61: #{tpu_custom_call.1} parent=47 // pred_check
          %p493 = pneg %p153
        $region62: #{tpu_custom_call.1} parent=47 // pred_check_branch
          %495 = sbr.rel (%p493) target = $region64
        $region63: #{tpu_custom_call.1} parent=47 // pred_region
          %s496 = sand.u32 %s32, 1
          %s497 = scalar_lea.sflag [#allocation13], %s496
          %s498 = sand.u32 %s143, 1
          %s499 = smul.addr %s498, 8
          %s500 = scalar_lea.vmem [#allocation12], %s499
          %s502 = ssub.s32 128, 128
          %503 = vsyncadd %s497, %s502
          %s504 = sadd.s32 %s40, %s39
          %s505 = smul.addr %s504, 128
          %s506 = scalar_lea.hbm %s3, %s505
          %s508 = sshll.u32 %s500, 4
          %s509 = int_to_ptr.vmem [resolvable:$true] %s508
          %511 = dma.hbm_to_vmem [thread:$0]  %s506, 128, %s509, %s497
        $region64: #{tpu_custom_call.1} parent=47 // pred_fallthru
          _
      $region48: #{tpu_custom_call.1} parent=5 // pred_fallthru
        _
      %p512 = scmp.le.s32.totalorder 1, %s32
      %p513 = scmp.lt.s32.totalorder %s32, 3
      %p514 = pnand %p512, %p513
      %p515 = pneg %p514
      // Predicated region
      $region65: #{tpu_custom_call.1} parent=5 // pred_check
        _
      $region66: #{tpu_custom_call.1} parent=5 // pred_check_branch
        %517 = sbr.rel (%p514) target = $region68
      $region67: #{tpu_custom_call.1} parent=5 // pred_region
        %s518 = ssub.s32 %s32, 1
        %s519 = sand.u32 %s66, 1
        %s520 = scalar_lea.sflag [#allocation7], %s519
        %s521 = sand.u32 %s66, 1
        %s522 = smul.addr %s521, 8
        %s523 = scalar_lea.vmem [#allocation6], %s522
        // Predicated region
        $region69: #{tpu_custom_call.1} parent=67 // pred_check
          %p524 = pneg %p79
        $region70: #{tpu_custom_call.1} parent=67 // pred_check_branch
          %526 = sbr.rel (%p524) target = $region72
        $region71: #{tpu_custom_call.1} parent=67 // pred_region
          %527 = dma.done %s520, 128
        $region72: #{tpu_custom_call.1} parent=67 // pred_fallthru
          _
        %s528 = sand.u32 %s37, 1
        %s529 = scalar_lea.sflag [#allocation10], %s528
        %s530 = sand.u32 %s92, 1
        %s531 = smul.addr %s530, 8
        %s532 = scalar_lea.vmem [#allocation9], %s531
        // Predicated region
        $region73: #{tpu_custom_call.1} parent=67 // pred_check
          %p533 = pneg %p105
        $region74: #{tpu_custom_call.1} parent=67 // pred_check_branch
          %535 = sbr.rel (%p533) target = $region76
        $region75: #{tpu_custom_call.1} parent=67 // pred_region
          %536 = dma.done %s529, 128
        $region76: #{tpu_custom_call.1} parent=67 // pred_fallthru
          _
        %s537 = sand.u32 %s37, 1
        %s538 = scalar_lea.sflag [#allocation10], %s537
        %s539 = sand.u32 %s118, 1
        %s540 = smul.addr %s539, 8
        %s541 = scalar_lea.vmem [#allocation11], %s540
        // Predicated region
        $region77: #{tpu_custom_call.1} parent=67 // pred_check
          %p542 = pneg %p131
        $region78: #{tpu_custom_call.1} parent=67 // pred_check_branch
          %544 = sbr.rel (%p542) target = $region80
        $region79: #{tpu_custom_call.1} parent=67 // pred_region
          %545 = dma.done %s538, 128
        $region80: #{tpu_custom_call.1} parent=67 // pred_fallthru
          _
        %s546 = sand.u32 %s37, 1
        %s547 = scalar_lea.sflag [#allocation13], %s546
        %s548 = sand.u32 %s146, 1
        %s549 = smul.addr %s548, 8
        %s550 = scalar_lea.vmem [#allocation12], %s549
        // Predicated region
        $region81: #{tpu_custom_call.1} parent=67 // pred_check
          %p551 = pneg %p159
        $region82: #{tpu_custom_call.1} parent=67 // pred_check_branch
          %553 = sbr.rel (%p551) target = $region84
        $region83: #{tpu_custom_call.1} parent=67 // pred_region
          %554 = dma.done %s547, 128
        $region84: #{tpu_custom_call.1} parent=67 // pred_fallthru
          _
        // Predicated region
        $region85: #{tpu_custom_call.1} parent=67 // pred_check
          %p555 = pneg %p180
        $region86: #{tpu_custom_call.1} parent=67 // pred_check_branch
          %557 = sbr.rel (%p555) target = $region88
        $region87: #{tpu_custom_call.1} parent=67 // pred_region
          %558 = dma.done [#allocation13], 512
        $region88: #{tpu_custom_call.1} parent=67 // pred_fallthru
          _
        // Predicated region
        $region89: #{tpu_custom_call.1} parent=67 // pred_check
          %p559 = pneg %p222
        $region90: #{tpu_custom_call.1} parent=67 // pred_check_branch
          %561 = sbr.rel (%p559) target = $region92
        $region91: #{tpu_custom_call.1} parent=67 // pred_region
          %562 = dma.done [#allocation16], 512
        $region92: #{tpu_custom_call.1} parent=67 // pred_fallthru
          _
        // Predicated region
        $region93: #{tpu_custom_call.1} parent=67 // pred_check
          %p563 = pneg %p264
        $region94: #{tpu_custom_call.1} parent=67 // pred_check_branch
          %565 = sbr.rel (%p563) target = $region96
        $region95: #{tpu_custom_call.1} parent=67 // pred_region
          %566 = dma.done [#allocation16], 512
        $region96: #{tpu_custom_call.1} parent=67 // pred_fallthru
          _
        // Predicated region
        $region97: #{tpu_custom_call.1} parent=67 // pred_check
          %p567 = pneg %p306
        $region98: #{tpu_custom_call.1} parent=67 // pred_check_branch
          %569 = sbr.rel (%p567) target = $region100
        $region99: #{tpu_custom_call.1} parent=67 // pred_region
          %570 = dma.done [#allocation19], 512
        $region100: #{tpu_custom_call.1} parent=67 // pred_fallthru
          _
        %s571 = sand.u32 %s66, 1
        %s572 = scalar_lea.sflag [#allocation7], %s571
        %s573 = sand.u32 %s66, 1
        %s574 = smul.addr %s573, 8
        %s575 = scalar_lea.vmem [#allocation6], %s574
        %p576 = pneg %p79
        %p577 = pneg %p76
        %s578 = sand.u32 %s37, 1
        %s579 = scalar_lea.sflag [#allocation10], %s578
        %s580 = sand.u32 %s92, 1
        %s581 = smul.addr %s580, 8
        %s582 = scalar_lea.vmem [#allocation9], %s581
        %p583 = pneg %p105
        %p584 = pneg %p102
        %s585 = sand.u32 %s37, 1
        %s586 = scalar_lea.sflag [#allocation10], %s585
        %s587 = sand.u32 %s118, 1
        %s588 = smul.addr %s587, 8
        %s589 = scalar_lea.vmem [#allocation11], %s588
        %p590 = pneg %p131
        %p591 = pneg %p128
        %s592 = sand.u32 %s37, 1
        %s593 = scalar_lea.sflag [#allocation13], %s592
        %s594 = sand.u32 %s146, 1
        %s595 = smul.addr %s594, 8
        %s596 = scalar_lea.vmem [#allocation12], %s595
        %p597 = pneg %p159
        %p598 = pneg %p156
        %p599 = pneg %p180
        %p600 = pneg %p177
        %p601 = pneg %p201
        %p602 = pneg %p198
        %p603 = pneg %p222
        %p604 = pneg %p219
        %p605 = pneg %p243
        %p606 = pneg %p240
        %p607 = pneg %p264
        %p608 = pneg %p261
        %p609 = pneg %p285
        %p610 = pneg %p282
        %p611 = pneg %p306
        %p612 = pneg %p303
        %p613 = pneg %p327
        %p614 = pneg %p324
        %p615 = pneg %p355
        %p616 = pneg %p352
        %s617 = sand.u32 %s342, 1
        %s618 = scalar_lea.sflag [#allocation8], %s617
        %s619 = sand.u32 %s342, 1
        %s620 = smul.addr %s619, 8
        %s621 = scalar_lea.vmem [#allocation20], %s620
        %p622 = scmp.eq.s32.totalorder %s44, 0
        // Predicated region
        $region101: #{tpu_custom_call.1} parent=67 // pred_check
          %p623 = pneg %p622
        $region102: #{tpu_custom_call.1} parent=67 // pred_check_branch
          %625 = sbr.rel (%p623) target = $region104
        $region103: #{tpu_custom_call.1} parent=67 // pred_region
          %vm626 = vcmask 261120
          %627 = vst.msk [vmem:[#allocation2] sm:$0xff] %vm626, 0.0
        $region104: #{tpu_custom_call.1} parent=67 // pred_fallthru
          _
        %p628 = scmp.eq.s32.totalorder %s43, 0
        // Predicated region
        $region105: #{tpu_custom_call.1} parent=67 // pred_check
          %p629 = pneg %p628
        $region106: #{tpu_custom_call.1} parent=67 // pred_check_branch
          %631 = sbr.rel (%p629) target = $region108
        $region107: #{tpu_custom_call.1} parent=67 // pred_region
          %v632 = vld [vmem:[%s532] sm:$0xff]
          %s633 = smul.u32 %s44, 32
          %s634 = scalar_lea.vmem [#allocation15], %s633
          %v635 = vld [vmem:[%s634] sm:$0xff]
          %v636 = vld [vmem:[%s634 + $0x8] sm:$0xff]
          %v637 = vld [vmem:[%s634 + $0x10] sm:$0xff]
          %v638 = vld [vmem:[%s634 + $0x18] sm:$0xff]
          %s639 = scalar_lea.vmem %s7, %s44
          %v640 = vld [vmem:[%s639] sm:$0x1]
          %v642 = vlaneseq
          %v643 = vshrl.u32 %v642, 7
          %v644 = vsub.s32 0, %v643
          %v645 = vrot.slane %v640, %v644
          %vm647 = vcmask 261120
          %v649 = vsel %vm647, %v632, 0
          %651 = vmatprep.subr.mxu0 0.0
          %652 = vmatpush1.msra.mxu0 0.0
          %653 = vmatprep.subr.mxu0 0.0
          %654 = vmatpush1.msra.mxu0 0.0
          %655 = vmatprep.subr.mxu0 0.0
          %656 = vmatpush1.msra.mxu0 0.0
          %657 = vmatprep.subr.mxu0 0.0
          %658 = vmatpush1.msra.mxu0 0.0
          %659 = vmatprep.subr.mxu0 0.0
          %660 = vmatpush1.msra.mxu0 0.0
          %661 = vmatprep.subr.mxu0 0.0
          %662 = vmatpush1.msra.mxu0 0.0
          %663 = vmatprep.subr.mxu0 0.0
          %664 = vmatpush1.msra.mxu0 0.0
          %665 = vmatprep.subr.mxu0 0.0
          %666 = vmatpush1.msra.mxu0 0.0
          %667 = vmatprep.subr.mxu0 0.0
          %668 = vmatpush1.msra.mxu0 0.0
          %669 = vmatprep.subr.mxu0 0.0
          %670 = vmatpush1.msra.mxu0 0.0
          %671 = vmatprep.subr.mxu0 0.0
          %672 = vmatpush1.msra.mxu0 0.0
          %673 = vmatprep.subr.mxu0 0.0
          %674 = vmatpush1.msra.mxu0 0.0
          %675 = vmatprep.subr.mxu0 0.0
          %676 = vmatpush1.msra.mxu0 %v638
          %677 = vmatprep.subr.mxu0 0.0
          %678 = vmatpush1.msra.mxu0 %v637
          %679 = vmatprep.subr.mxu0 0.0
          %680 = vmatpush1.msra.mxu0 %v636
          %681 = vmatprep.subr.mxu0 0.0
          %682 = vmatpush1.msra.mxu0 %v635
          %683 = vmatprep.subr.mxu0 0.0
          %684 = vmatpush2.msra.mxu0 0.0
          %685 = vmatprep.subr.mxu0 0.0
          %686 = vmatpush2.msra.mxu0 0.0
          %687 = vmatprep.subr.mxu0 0.0
          %688 = vmatpush2.msra.mxu0 0.0
          %689 = vmatprep.subr.mxu0 0.0
          %690 = vmatpush2.msra.mxu0 0.0
          %691 = vmatprep.subr.mxu0 0.0
          %692 = vmatpush2.msra.mxu0 0.0
          %693 = vmatprep.subr.mxu0 0.0
          %694 = vmatpush2.msra.mxu0 0.0
          %695 = vmatprep.subr.mxu0 0.0
          %696 = vmatpush2.msra.mxu0 0.0
          %697 = vmatprep.subr.mxu0 0.0
          %698 = vmatpush2.msra.mxu0 0.0
          %699 = vmatprep.subr.mxu0 0.0
          %700 = vmatpush2.msra.mxu0 0.0
          %701 = vmatprep.subr.mxu0 0.0
          %702 = vmatpush2.msra.mxu0 0.0
          %703 = vmatprep.subr.mxu0 0.0
          %704 = vmatpush2.msra.mxu0 0.0
          %705 = vmatprep.subr.mxu0 0.0
          %706 = vmatpush2.msra.mxu0 0.0
          %707 = vmatprep.subr.mxu0 0.0
          %708 = vmatpush2.msra.mxu0 0.0
          %709 = vmatprep.subr.mxu0 0.0
          %710 = vmatpush2.msra.mxu0 0.0
          %711 = vmatprep.subr.mxu0 0.0
          %712 = vmatpush2.msra.mxu0 0.0
          %713 = vmatprep.subr.mxu0 0.0
          %714 = vmatpush2.msra.mxu0 0.0
          %715 = vmatprep.mubr.f32.mxu0 0.0
          %716 = vmatmul.mubr.f32.gmra.mxu0 %v649
          %v717 = vpop.f32.mrf.mxu0
          %v718 = vadd.f32 %v645, %v717
          %v719 = vpop.f32.mrf.mxu0
          %720 = vdwg.mxu0
          %v721 = vld [vmem:[%s541] sm:$0xff]
          %s722 = scalar_lea.vmem [#allocation17], %s633
          %v723 = vld [vmem:[%s722] sm:$0xff]
          %v724 = vld [vmem:[%s722 + $0x8] sm:$0xff]
          %v725 = vld [vmem:[%s722 + $0x10] sm:$0xff]
          %v726 = vld [vmem:[%s722 + $0x18] sm:$0xff]
          %s727 = scalar_lea.vmem %s9, %s44
          %v728 = vld [vmem:[%s727] sm:$0x1]
          %v730 = vlaneseq
          %v731 = vshrl.u32 %v730, 7
          %v732 = vsub.s32 0, %v731
          %v733 = vrot.slane %v728, %v732
          %v736 = vsel %vm647, %v721, 0
          %738 = vmatprep.subr.mxu0 0.0
          %739 = vmatpush1.msra.mxu0 0.0
          %740 = vmatprep.subr.mxu0 0.0
          %741 = vmatpush1.msra.mxu0 0.0
          %742 = vmatprep.subr.mxu0 0.0
          %743 = vmatpush1.msra.mxu0 0.0
          %744 = vmatprep.subr.mxu0 0.0
          %745 = vmatpush1.msra.mxu0 0.0
          %746 = vmatprep.subr.mxu0 0.0
          %747 = vmatpush1.msra.mxu0 0.0
          %748 = vmatprep.subr.mxu0 0.0
          %749 = vmatpush1.msra.mxu0 0.0
          %750 = vmatprep.subr.mxu0 0.0
          %751 = vmatpush1.msra.mxu0 0.0
          %752 = vmatprep.subr.mxu0 0.0
          %753 = vmatpush1.msra.mxu0 0.0
          %754 = vmatprep.subr.mxu0 0.0
          %755 = vmatpush1.msra.mxu0 0.0
          %756 = vmatprep.subr.mxu0 0.0
          %757 = vmatpush1.msra.mxu0 0.0
          %758 = vmatprep.subr.mxu0 0.0
          %759 = vmatpush1.msra.mxu0 0.0
          %760 = vmatprep.subr.mxu0 0.0
          %761 = vmatpush1.msra.mxu0 0.0
          %762 = vmatprep.subr.mxu0 0.0
          %763 = vmatpush1.msra.mxu0 %v726
          %764 = vmatprep.subr.mxu0 0.0
          %765 = vmatpush1.msra.mxu0 %v725
          %766 = vmatprep.subr.mxu0 0.0
          %767 = vmatpush1.msra.mxu0 %v724
          %768 = vmatprep.subr.mxu0 0.0
          %769 = vmatpush1.msra.mxu0 %v723
          %770 = vmatprep.subr.mxu0 0.0
          %771 = vmatpush2.msra.mxu0 0.0
          %772 = vmatprep.subr.mxu0 0.0
          %773 = vmatpush2.msra.mxu0 0.0
          %774 = vmatprep.subr.mxu0 0.0
          %775 = vmatpush2.msra.mxu0 0.0
          %776 = vmatprep.subr.mxu0 0.0
          %777 = vmatpush2.msra.mxu0 0.0
          %778 = vmatprep.subr.mxu0 0.0
          %779 = vmatpush2.msra.mxu0 0.0
          %780 = vmatprep.subr.mxu0 0.0
          %781 = vmatpush2.msra.mxu0 0.0
          %782 = vmatprep.subr.mxu0 0.0
          %783 = vmatpush2.msra.mxu0 0.0
          %784 = vmatprep.subr.mxu0 0.0
          %785 = vmatpush2.msra.mxu0 0.0
          %786 = vmatprep.subr.mxu0 0.0
          %787 = vmatpush2.msra.mxu0 0.0
          %788 = vmatprep.subr.mxu0 0.0
          %789 = vmatpush2.msra.mxu0 0.0
          %790 = vmatprep.subr.mxu0 0.0
          %791 = vmatpush2.msra.mxu0 0.0
          %792 = vmatprep.subr.mxu0 0.0
          %793 = vmatpush2.msra.mxu0 0.0
          %794 = vmatprep.subr.mxu0 0.0
          %795 = vmatpush2.msra.mxu0 0.0
          %796 = vmatprep.subr.mxu0 0.0
          %797 = vmatpush2.msra.mxu0 0.0
          %798 = vmatprep.subr.mxu0 0.0
          %799 = vmatpush2.msra.mxu0 0.0
          %800 = vmatprep.subr.mxu0 0.0
          %801 = vmatpush2.msra.mxu0 0.0
          %802 = vmatprep.mubr.f32.mxu0 0.0
          %803 = vmatmul.mubr.f32.gmra.mxu0 %v736
          %v804 = vpop.f32.mrf.mxu0
          %v805 = vadd.f32 %v733, %v804
          %v806 = vpop.f32.mrf.mxu0
          %807 = vdwg.mxu0
          %s808 = smul.u32 %s44, 8
          %s809 = scalar_lea.vmem [#allocation4], %s808
          %810 = vst.msk [vmem:[%s809] sm:$0xff] %vm647, %v718
          %s811 = scalar_lea.vmem [#allocation5], %s808
          %812 = vst.msk [vmem:[%s811] sm:$0xff] %vm647, %v805
        $region108: #{tpu_custom_call.1} parent=67 // pred_fallthru
          _
        %v813 = vld [vmem:[%s523] sm:$0xff]
        %s814 = smul.u32 %s44, 32
        %s815 = scalar_lea.vmem [#allocation14], %s814
        %v816 = vld [vmem:[%s815] sm:$0xff]
        %v817 = vld [vmem:[%s815 + $0x8] sm:$0xff]
        %v818 = vld [vmem:[%s815 + $0x10] sm:$0xff]
        %v819 = vld [vmem:[%s815 + $0x18] sm:$0xff]
        %s820 = scalar_lea.vmem %s5, %s44
        %v821 = vld [vmem:[%s820] sm:$0x1]
        %v823 = vlaneseq
        %v824 = vshrl.u32 %v823, 7
        %v825 = vsub.s32 0, %v824
        %v826 = vrot.slane %v821, %v825
        %vm828 = vcmask 261120
        %v830 = vsel %vm828, %v813, 0
        %832 = vmatprep.subr.mxu0 0.0
        %833 = vmatpush1.msra.mxu0 0.0
        %834 = vmatprep.subr.mxu0 0.0
        %835 = vmatpush1.msra.mxu0 0.0
        %836 = vmatprep.subr.mxu0 0.0
        %837 = vmatpush1.msra.mxu0 0.0
        %838 = vmatprep.subr.mxu0 0.0
        %839 = vmatpush1.msra.mxu0 0.0
        %840 = vmatprep.subr.mxu0 0.0
        %841 = vmatpush1.msra.mxu0 0.0
        %842 = vmatprep.subr.mxu0 0.0
        %843 = vmatpush1.msra.mxu0 0.0
        %844 = vmatprep.subr.mxu0 0.0
        %845 = vmatpush1.msra.mxu0 0.0
        %846 = vmatprep.subr.mxu0 0.0
        %847 = vmatpush1.msra.mxu0 0.0
        %848 = vmatprep.subr.mxu0 0.0
        %849 = vmatpush1.msra.mxu0 0.0
        %850 = vmatprep.subr.mxu0 0.0
        %851 = vmatpush1.msra.mxu0 0.0
        %852 = vmatprep.subr.mxu0 0.0
        %853 = vmatpush1.msra.mxu0 0.0
        %854 = vmatprep.subr.mxu0 0.0
        %855 = vmatpush1.msra.mxu0 0.0
        %856 = vmatprep.subr.mxu0 0.0
        %857 = vmatpush1.msra.mxu0 %v819
        %858 = vmatprep.subr.mxu0 0.0
        %859 = vmatpush1.msra.mxu0 %v818
        %860 = vmatprep.subr.mxu0 0.0
        %861 = vmatpush1.msra.mxu0 %v817
        %862 = vmatprep.subr.mxu0 0.0
        %863 = vmatpush1.msra.mxu0 %v816
        %864 = vmatprep.subr.mxu0 0.0
        %865 = vmatpush2.msra.mxu0 0.0
        %866 = vmatprep.subr.mxu0 0.0
        %867 = vmatpush2.msra.mxu0 0.0
        %868 = vmatprep.subr.mxu0 0.0
        %869 = vmatpush2.msra.mxu0 0.0
        %870 = vmatprep.subr.mxu0 0.0
        %871 = vmatpush2.msra.mxu0 0.0
        %872 = vmatprep.subr.mxu0 0.0
        %873 = vmatpush2.msra.mxu0 0.0
        %874 = vmatprep.subr.mxu0 0.0
        %875 = vmatpush2.msra.mxu0 0.0
        %876 = vmatprep.subr.mxu0 0.0
        %877 = vmatpush2.msra.mxu0 0.0
        %878 = vmatprep.subr.mxu0 0.0
        %879 = vmatpush2.msra.mxu0 0.0
        %880 = vmatprep.subr.mxu0 0.0
        %881 = vmatpush2.msra.mxu0 0.0
        %882 = vmatprep.subr.mxu0 0.0
        %883 = vmatpush2.msra.mxu0 0.0
        %884 = vmatprep.subr.mxu0 0.0
        %885 = vmatpush2.msra.mxu0 0.0
        %886 = vmatprep.subr.mxu0 0.0
        %887 = vmatpush2.msra.mxu0 0.0
        %888 = vmatprep.subr.mxu0 0.0
        %889 = vmatpush2.msra.mxu0 0.0
        %890 = vmatprep.subr.mxu0 0.0
        %891 = vmatpush2.msra.mxu0 0.0
        %892 = vmatprep.subr.mxu0 0.0
        %893 = vmatpush2.msra.mxu0 0.0
        %894 = vmatprep.subr.mxu0 0.0
        %895 = vmatpush2.msra.mxu0 0.0
        %896 = vmatprep.mubr.f32.mxu0 0.0
        %897 = vmatmul.mubr.f32.gmra.mxu0 %v830
        %v898 = vpop.f32.mrf.mxu0
        %v899 = vadd.f32 %v826, %v898
        %v900 = vpop.f32.mrf.mxu0
        %901 = vdwg.mxu0
        %s902 = smul.u32 %s44, 8
        %s903 = scalar_lea.vmem [#allocation4], %s902
        %v904 = vld [vmem:[%s903] sm:$0xff]
        %s905 = scalar_lea.vmem [#allocation5], %s902
        %v906 = vld [vmem:[%s905] sm:$0xff]
        %v907 = vld [vmem:[%s550] sm:$0xff]
        %vm908 = vcmp.ne.f32.partialorder %v907, 0.0
        %vm909 = vcmask 64512
        %v911 = vsel %vm909, %v899, 0
        %v914 = vsel %vm909, %v904, 0
        %916 = vmatprep.subr.mxu0 0.0
        %917 = vmatpush1.xpose.msra.mxu0 0.0
        %918 = vmatprep.subr.mxu0 0.0
        %919 = vmatpush1.xpose.msra.mxu0 0.0
        %920 = vmatprep.subr.mxu0 0.0
        %921 = vmatpush1.xpose.msra.mxu0 0.0
        %922 = vmatprep.subr.mxu0 0.0
        %923 = vmatpush1.xpose.msra.mxu0 0.0
        %924 = vmatprep.subr.mxu0 0.0
        %925 = vmatpush1.xpose.msra.mxu0 0.0
        %926 = vmatprep.subr.mxu0 0.0
        %927 = vmatpush1.xpose.msra.mxu0 0.0
        %928 = vmatprep.subr.mxu0 0.0
        %929 = vmatpush1.xpose.msra.mxu0 0.0
        %930 = vmatprep.subr.mxu0 0.0
        %931 = vmatpush1.xpose.msra.mxu0 0.0
        %932 = vmatprep.subr.mxu0 0.0
        %933 = vmatpush1.xpose.msra.mxu0 0.0
        %934 = vmatprep.subr.mxu0 0.0
        %935 = vmatpush1.xpose.msra.mxu0 0.0
        %936 = vmatprep.subr.mxu0 0.0
        %937 = vmatpush1.xpose.msra.mxu0 0.0
        %938 = vmatprep.subr.mxu0 0.0
        %939 = vmatpush1.xpose.msra.mxu0 0.0
        %940 = vmatprep.subr.mxu0 0.0
        %941 = vmatpush1.xpose.msra.mxu0 0.0
        %942 = vmatprep.subr.mxu0 0.0
        %943 = vmatpush1.xpose.msra.mxu0 0.0
        %944 = vmatprep.subr.mxu0 0.0
        %945 = vmatpush1.xpose.msra.mxu0 0.0
        %946 = vmatprep.subr.mxu0 0.0
        %947 = vmatpush1.xpose.msra.mxu0 %v914
        %948 = vmatprep.subr.mxu0 0.0
        %949 = vmatpush2.xpose.msra.mxu0 0.0
        %950 = vmatprep.subr.mxu0 0.0
        %951 = vmatpush2.xpose.msra.mxu0 0.0
        %952 = vmatprep.subr.mxu0 0.0
        %953 = vmatpush2.xpose.msra.mxu0 0.0
        %954 = vmatprep.subr.mxu0 0.0
        %955 = vmatpush2.xpose.msra.mxu0 0.0
        %956 = vmatprep.subr.mxu0 0.0
        %957 = vmatpush2.xpose.msra.mxu0 0.0
        %958 = vmatprep.subr.mxu0 0.0
        %959 = vmatpush2.xpose.msra.mxu0 0.0
        %960 = vmatprep.subr.mxu0 0.0
        %961 = vmatpush2.xpose.msra.mxu0 0.0
        %962 = vmatprep.subr.mxu0 0.0
        %963 = vmatpush2.xpose.msra.mxu0 0.0
        %964 = vmatprep.subr.mxu0 0.0
        %965 = vmatpush2.xpose.msra.mxu0 0.0
        %966 = vmatprep.subr.mxu0 0.0
        %967 = vmatpush2.xpose.msra.mxu0 0.0
        %968 = vmatprep.subr.mxu0 0.0
        %969 = vmatpush2.xpose.msra.mxu0 0.0
        %970 = vmatprep.subr.mxu0 0.0
        %971 = vmatpush2.xpose.msra.mxu0 0.0
        %972 = vmatprep.subr.mxu0 0.0
        %973 = vmatpush2.xpose.msra.mxu0 0.0
        %974 = vmatprep.subr.mxu0 0.0
        %975 = vmatpush2.xpose.msra.mxu0 0.0
        %976 = vmatprep.subr.mxu0 0.0
        %977 = vmatpush2.xpose.msra.mxu0 0.0
        %978 = vmatprep.subr.mxu0 0.0
        %979 = vmatpush2.xpose.msra.mxu0 0.0
        %980 = vmatprep.mubr.f32.mxu0 0.0
        %981 = vmatmul.mubr.f32.gmra.mxu0 %v911
        %v982 = vpop.f32.mrf.mxu0
        %v983 = vadd.f32 0.0, %v982
        %v984 = vpop.f32.mrf.mxu0
        %985 = vdwg.mxu0
        %v986 = vsel %vm908, %v983, -3.4028235e+38
        %v987 = vsel %vm909, %v986, -inf
        %988 = vmax.xlane.f32.xlu0 %v987
        %v989 = vpop.xlane.xlu0 %988
        %v990 = vsub.f32 %v986, %v989
        %v991 = vmul.f32 %v990, 1.442695
        %v992 = vpow.pop %v991
        %v993 = vsel %vm909, %v992, 0.0
        %994 = vadd.xlane.f32.xlu0 %v993
        %v995 = vpop.xlane.xlu0 %994
        %v996 = vrcp.pop %v995
        %v997 = vmul.f32 %v995, %v996
        %v998 = vsub.f32 2.0, %v997
        %v999 = vmul.f32 %v996, %v998
        %v1001 = vsel %vm909, %v992, 0
        %1003 = vmatprep.subr.mxu0 0.0
        %1004 = vmatpush1.msra.mxu0 0.0
        %1005 = vmatprep.subr.mxu0 0.0
        %1006 = vmatpush1.msra.mxu0 0.0
        %1007 = vmatprep.subr.mxu0 0.0
        %1008 = vmatpush1.msra.mxu0 0.0
        %1009 = vmatprep.subr.mxu0 0.0
        %1010 = vmatpush1.msra.mxu0 0.0
        %1011 = vmatprep.subr.mxu0 0.0
        %1012 = vmatpush1.msra.mxu0 0.0
        %1013 = vmatprep.subr.mxu0 0.0
        %1014 = vmatpush1.msra.mxu0 0.0
        %1015 = vmatprep.subr.mxu0 0.0
        %1016 = vmatpush1.msra.mxu0 0.0
        %1017 = vmatprep.subr.mxu0 0.0
        %1018 = vmatpush1.msra.mxu0 0.0
        %1019 = vmatprep.subr.mxu0 0.0
        %1020 = vmatpush1.msra.mxu0 0.0
        %1021 = vmatprep.subr.mxu0 0.0
        %1022 = vmatpush1.msra.mxu0 0.0
        %1023 = vmatprep.subr.mxu0 0.0
        %1024 = vmatpush1.msra.mxu0 0.0
        %1025 = vmatprep.subr.mxu0 0.0
        %1026 = vmatpush1.msra.mxu0 0.0
        %1027 = vmatprep.subr.mxu0 0.0
        %1028 = vmatpush1.msra.mxu0 0.0
        %1029 = vmatprep.subr.mxu0 0.0
        %1030 = vmatpush1.msra.mxu0 0.0
        %1031 = vmatprep.subr.mxu0 0.0
        %1032 = vmatpush1.msra.mxu0 0.0
        %1033 = vmatprep.subr.mxu0 0.0
        %1034 = vmatpush1.msra.mxu0 %v906
        %1035 = vmatprep.subr.mxu0 0.0
        %1036 = vmatpush2.msra.mxu0 0.0
        %1037 = vmatprep.subr.mxu0 0.0
        %1038 = vmatpush2.msra.mxu0 0.0
        %1039 = vmatprep.subr.mxu0 0.0
        %1040 = vmatpush2.msra.mxu0 0.0
        %1041 = vmatprep.subr.mxu0 0.0
        %1042 = vmatpush2.msra.mxu0 0.0
        %1043 = vmatprep.subr.mxu0 0.0
        %1044 = vmatpush2.msra.mxu0 0.0
        %1045 = vmatprep.subr.mxu0 0.0
        %1046 = vmatpush2.msra.mxu0 0.0
        %1047 = vmatprep.subr.mxu0 0.0
        %1048 = vmatpush2.msra.mxu0 0.0
        %1049 = vmatprep.subr.mxu0 0.0
        %1050 = vmatpush2.msra.mxu0 0.0
        %1051 = vmatprep.subr.mxu0 0.0
        %1052 = vmatpush2.msra.mxu0 0.0
        %1053 = vmatprep.subr.mxu0 0.0
        %1054 = vmatpush2.msra.mxu0 0.0
        %1055 = vmatprep.subr.mxu0 0.0
        %1056 = vmatpush2.msra.mxu0 0.0
        %1057 = vmatprep.subr.mxu0 0.0
        %1058 = vmatpush2.msra.mxu0 0.0
        %1059 = vmatprep.subr.mxu0 0.0
        %1060 = vmatpush2.msra.mxu0 0.0
        %1061 = vmatprep.subr.mxu0 0.0
        %1062 = vmatpush2.msra.mxu0 0.0
        %1063 = vmatprep.subr.mxu0 0.0
        %1064 = vmatpush2.msra.mxu0 0.0
        %1065 = vmatprep.subr.mxu0 0.0
        %1066 = vmatpush2.msra.mxu0 0.0
        %1067 = vmatprep.mubr.f32.mxu0 0.0
        %1068 = vmatmul.mubr.f32.gmra.mxu0 %v1001
        %v1069 = vpop.f32.mrf.mxu0
        %v1070 = vadd.f32 0.0, %v1069
        %v1071 = vpop.f32.mrf.mxu0
        %1072 = vdwg.mxu0
        %v1073 = vmul.f32 %v1070, %v999
        %1074 = vst.msk [vmem:[#allocation3] sm:$0xff] %vm909, %v1073
        %1075 = vrot.lane.b32.xlu0 %v899, 120
        %v1076 = vpop.permute.xlu0 %1075
        %1077 = vrot.lane.b32.xlu0 %v904, 120
        %v1078 = vpop.permute.xlu0 %1077
        %v1079 = vsel %vm909, %v1076, 0
        %v1081 = vsel %vm909, %v1078, 0
        %1083 = vmatprep.subr.mxu0 0.0
        %1084 = vmatpush1.xpose.msra.mxu0 0.0
        %1085 = vmatprep.subr.mxu0 0.0
        %1086 = vmatpush1.xpose.msra.mxu0 0.0
        %1087 = vmatprep.subr.mxu0 0.0
        %1088 = vmatpush1.xpose.msra.mxu0 0.0
        %1089 = vmatprep.subr.mxu0 0.0
        %1090 = vmatpush1.xpose.msra.mxu0 0.0
        %1091 = vmatprep.subr.mxu0 0.0
        %1092 = vmatpush1.xpose.msra.mxu0 0.0
        %1093 = vmatprep.subr.mxu0 0.0
        %1094 = vmatpush1.xpose.msra.mxu0 0.0
        %1095 = vmatprep.subr.mxu0 0.0
        %1096 = vmatpush1.xpose.msra.mxu0 0.0
        %1097 = vmatprep.subr.mxu0 0.0
        %1098 = vmatpush1.xpose.msra.mxu0 0.0
        %1099 = vmatprep.subr.mxu0 0.0
        %1100 = vmatpush1.xpose.msra.mxu0 0.0
        %1101 = vmatprep.subr.mxu0 0.0
        %1102 = vmatpush1.xpose.msra.mxu0 0.0
        %1103 = vmatprep.subr.mxu0 0.0
        %1104 = vmatpush1.xpose.msra.mxu0 0.0
        %1105 = vmatprep.subr.mxu0 0.0
        %1106 = vmatpush1.xpose.msra.mxu0 0.0
        %1107 = vmatprep.subr.mxu0 0.0
        %1108 = vmatpush1.xpose.msra.mxu0 0.0
        %1109 = vmatprep.subr.mxu0 0.0
        %1110 = vmatpush1.xpose.msra.mxu0 0.0
        %1111 = vmatprep.subr.mxu0 0.0
        %1112 = vmatpush1.xpose.msra.mxu0 0.0
        %1113 = vmatprep.subr.mxu0 0.0
        %1114 = vmatpush1.xpose.msra.mxu0 %v1081
        %1115 = vmatprep.subr.mxu0 0.0
        %1116 = vmatpush2.xpose.msra.mxu0 0.0
        %1117 = vmatprep.subr.mxu0 0.0
        %1118 = vmatpush2.xpose.msra.mxu0 0.0
        %1119 = vmatprep.subr.mxu0 0.0
        %1120 = vmatpush2.xpose.msra.mxu0 0.0
        %1121 = vmatprep.subr.mxu0 0.0
        %1122 = vmatpush2.xpose.msra.mxu0 0.0
        %1123 = vmatprep.subr.mxu0 0.0
        %1124 = vmatpush2.xpose.msra.mxu0 0.0
        %1125 = vmatprep.subr.mxu0 0.0
        %1126 = vmatpush2.xpose.msra.mxu0 0.0
        %1127 = vmatprep.subr.mxu0 0.0
        %1128 = vmatpush2.xpose.msra.mxu0 0.0
        %1129 = vmatprep.subr.mxu0 0.0
        %1130 = vmatpush2.xpose.msra.mxu0 0.0
        %1131 = vmatprep.subr.mxu0 0.0
        %1132 = vmatpush2.xpose.msra.mxu0 0.0
        %1133 = vmatprep.subr.mxu0 0.0
        %1134 = vmatpush2.xpose.msra.mxu0 0.0
        %1135 = vmatprep.subr.mxu0 0.0
        %1136 = vmatpush2.xpose.msra.mxu0 0.0
        %1137 = vmatprep.subr.mxu0 0.0
        %1138 = vmatpush2.xpose.msra.mxu0 0.0
        %1139 = vmatprep.subr.mxu0 0.0
        %1140 = vmatpush2.xpose.msra.mxu0 0.0
        %1141 = vmatprep.subr.mxu0 0.0
        %1142 = vmatpush2.xpose.msra.mxu0 0.0
        %1143 = vmatprep.subr.mxu0 0.0
        %1144 = vmatpush2.xpose.msra.mxu0 0.0
        %1145 = vmatprep.subr.mxu0 0.0
        %1146 = vmatpush2.xpose.msra.mxu0 0.0
        %1147 = vmatprep.mubr.f32.mxu0 0.0
        %1148 = vmatmul.mubr.f32.gmra.mxu0 %v1079
        %v1149 = vpop.f32.mrf.mxu0
        %v1150 = vadd.f32 0.0, %v1149
        %v1151 = vpop.f32.mrf.mxu0
        %1152 = vdwg.mxu0
        %v1153 = vsel %vm908, %v1150, -3.4028235e+38
        %v1154 = vsel %vm909, %v1153, -inf
        %1155 = vmax.xlane.f32.xlu0 %v1154
        %v1156 = vpop.xlane.xlu0 %1155
        %v1157 = vsub.f32 %v1153, %v1156
        %v1158 = vmul.f32 %v1157, 1.442695
        %v1159 = vpow.pop %v1158
        %v1160 = vsel %vm909, %v1159, 0.0
        %1161 = vadd.xlane.f32.xlu0 %v1160
        %v1162 = vpop.xlane.xlu0 %1161
        %v1163 = vrcp.pop %v1162
        %v1164 = vmul.f32 %v1162, %v1163
        %v1165 = vsub.f32 2.0, %v1164
        %v1166 = vmul.f32 %v1163, %v1165
        %1168 = vrot.lane.b32.xlu0 %v906, 120
        %v1169 = vpop.permute.xlu0 %1168
        %v1172 = vsel %vm909, %v1159, 0
        %1174 = vmatprep.subr.mxu0 0.0
        %1175 = vmatpush1.msra.mxu0 0.0
        %1176 = vmatprep.subr.mxu0 0.0
        %1177 = vmatpush1.msra.mxu0 0.0
        %1178 = vmatprep.subr.mxu0 0.0
        %1179 = vmatpush1.msra.mxu0 0.0
        %1180 = vmatprep.subr.mxu0 0.0
        %1181 = vmatpush1.msra.mxu0 0.0
        %1182 = vmatprep.subr.mxu0 0.0
        %1183 = vmatpush1.msra.mxu0 0.0
        %1184 = vmatprep.subr.mxu0 0.0
        %1185 = vmatpush1.msra.mxu0 0.0
        %1186 = vmatprep.subr.mxu0 0.0
        %1187 = vmatpush1.msra.mxu0 0.0
        %1188 = vmatprep.subr.mxu0 0.0
        %1189 = vmatpush1.msra.mxu0 0.0
        %1190 = vmatprep.subr.mxu0 0.0
        %1191 = vmatpush1.msra.mxu0 0.0
        %1192 = vmatprep.subr.mxu0 0.0
        %1193 = vmatpush1.msra.mxu0 0.0
        %1194 = vmatprep.subr.mxu0 0.0
        %1195 = vmatpush1.msra.mxu0 0.0
        %1196 = vmatprep.subr.mxu0 0.0
        %1197 = vmatpush1.msra.mxu0 0.0
        %1198 = vmatprep.subr.mxu0 0.0
        %1199 = vmatpush1.msra.mxu0 0.0
        %1200 = vmatprep.subr.mxu0 0.0
        %1201 = vmatpush1.msra.mxu0 0.0
        %1202 = vmatprep.subr.mxu0 0.0
        %1203 = vmatpush1.msra.mxu0 0.0
        %1204 = vmatprep.subr.mxu0 0.0
        %1205 = vmatpush1.msra.mxu0 %v1169
        %1206 = vmatprep.subr.mxu0 0.0
        %1207 = vmatpush2.msra.mxu0 0.0
        %1208 = vmatprep.subr.mxu0 0.0
        %1209 = vmatpush2.msra.mxu0 0.0
        %1210 = vmatprep.subr.mxu0 0.0
        %1211 = vmatpush2.msra.mxu0 0.0
        %1212 = vmatprep.subr.mxu0 0.0
        %1213 = vmatpush2.msra.mxu0 0.0
        %1214 = vmatprep.subr.mxu0 0.0
        %1215 = vmatpush2.msra.mxu0 0.0
        %1216 = vmatprep.subr.mxu0 0.0
        %1217 = vmatpush2.msra.mxu0 0.0
        %1218 = vmatprep.subr.mxu0 0.0
        %1219 = vmatpush2.msra.mxu0 0.0
        %1220 = vmatprep.subr.mxu0 0.0
        %1221 = vmatpush2.msra.mxu0 0.0
        %1222 = vmatprep.subr.mxu0 0.0
        %1223 = vmatpush2.msra.mxu0 0.0
        %1224 = vmatprep.subr.mxu0 0.0
        %1225 = vmatpush2.msra.mxu0 0.0
        %1226 = vmatprep.subr.mxu0 0.0
        %1227 = vmatpush2.msra.mxu0 0.0
        %1228 = vmatprep.subr.mxu0 0.0
        %1229 = vmatpush2.msra.mxu0 0.0
        %1230 = vmatprep.subr.mxu0 0.0
        %1231 = vmatpush2.msra.mxu0 0.0
        %1232 = vmatprep.subr.mxu0 0.0
        %1233 = vmatpush2.msra.mxu0 0.0
        %1234 = vmatprep.subr.mxu0 0.0
        %1235 = vmatpush2.msra.mxu0 0.0
        %1236 = vmatprep.subr.mxu0 0.0
        %1237 = vmatpush2.msra.mxu0 0.0
        %1238 = vmatprep.mubr.f32.mxu0 0.0
        %1239 = vmatmul.mubr.f32.gmra.mxu0 %v1172
        %v1240 = vpop.f32.mrf.mxu0
        %v1241 = vadd.f32 0.0, %v1240
        %v1242 = vpop.f32.mrf.mxu0
        %1243 = vdwg.mxu0
        %v1244 = vmul.f32 %v1241, %v1166
        %1246 = vrot.lane.b32.xlu0 %v1244, 8
        %v1247 = vpop.permute.xlu0 %1246
        %vm1249 = vcmask 130112
        %1250 = vst.msk [vmem:[#allocation3] sm:$0xff] %vm1249, %v1247
        %1251 = vrot.lane.b32.xlu0 %v899, 112
        %v1252 = vpop.permute.xlu0 %1251
        %1253 = vrot.lane.b32.xlu0 %v904, 112
        %v1254 = vpop.permute.xlu0 %1253
        %v1255 = vsel %vm909, %v1252, 0
        %v1257 = vsel %vm909, %v1254, 0
        %1259 = vmatprep.subr.mxu0 0.0
        %1260 = vmatpush1.xpose.msra.mxu0 0.0
        %1261 = vmatprep.subr.mxu0 0.0
        %1262 = vmatpush1.xpose.msra.mxu0 0.0
        %1263 = vmatprep.subr.mxu0 0.0
        %1264 = vmatpush1.xpose.msra.mxu0 0.0
        %1265 = vmatprep.subr.mxu0 0.0
        %1266 = vmatpush1.xpose.msra.mxu0 0.0
        %1267 = vmatprep.subr.mxu0 0.0
        %1268 = vmatpush1.xpose.msra.mxu0 0.0
        %1269 = vmatprep.subr.mxu0 0.0
        %1270 = vmatpush1.xpose.msra.mxu0 0.0
        %1271 = vmatprep.subr.mxu0 0.0
        %1272 = vmatpush1.xpose.msra.mxu0 0.0
        %1273 = vmatprep.subr.mxu0 0.0
        %1274 = vmatpush1.xpose.msra.mxu0 0.0
        %1275 = vmatprep.subr.mxu0 0.0
        %1276 = vmatpush1.xpose.msra.mxu0 0.0
        %1277 = vmatprep.subr.mxu0 0.0
        %1278 = vmatpush1.xpose.msra.mxu0 0.0
        %1279 = vmatprep.subr.mxu0 0.0
        %1280 = vmatpush1.xpose.msra.mxu0 0.0
        %1281 = vmatprep.subr.mxu0 0.0
        %1282 = vmatpush1.xpose.msra.mxu0 0.0
        %1283 = vmatprep.subr.mxu0 0.0
        %1284 = vmatpush1.xpose.msra.mxu0 0.0
        %1285 = vmatprep.subr.mxu0 0.0
        %1286 = vmatpush1.xpose.msra.mxu0 0.0
        %1287 = vmatprep.subr.mxu0 0.0
        %1288 = vmatpush1.xpose.msra.mxu0 0.0
        %1289 = vmatprep.subr.mxu0 0.0
        %1290 = vmatpush1.xpose.msra.mxu0 %v1257
        %1291 = vmatprep.subr.mxu0 0.0
        %1292 = vmatpush2.xpose.msra.mxu0 0.0
        %1293 = vmatprep.subr.mxu0 0.0
        %1294 = vmatpush2.xpose.msra.mxu0 0.0
        %1295 = vmatprep.subr.mxu0 0.0
        %1296 = vmatpush2.xpose.msra.mxu0 0.0
        %1297 = vmatprep.subr.mxu0 0.0
        %1298 = vmatpush2.xpose.msra.mxu0 0.0
        %1299 = vmatprep.subr.mxu0 0.0
        %1300 = vmatpush2.xpose.msra.mxu0 0.0
        %1301 = vmatprep.subr.mxu0 0.0
        %1302 = vmatpush2.xpose.msra.mxu0 0.0
        %1303 = vmatprep.subr.mxu0 0.0
        %1304 = vmatpush2.xpose.msra.mxu0 0.0
        %1305 = vmatprep.subr.mxu0 0.0
        %1306 = vmatpush2.xpose.msra.mxu0 0.0
        %1307 = vmatprep.subr.mxu0 0.0
        %1308 = vmatpush2.xpose.msra.mxu0 0.0
        %1309 = vmatprep.subr.mxu0 0.0
        %1310 = vmatpush2.xpose.msra.mxu0 0.0
        %1311 = vmatprep.subr.mxu0 0.0
        %1312 = vmatpush2.xpose.msra.mxu0 0.0
        %1313 = vmatprep.subr.mxu0 0.0
        %1314 = vmatpush2.xpose.msra.mxu0 0.0
        %1315 = vmatprep.subr.mxu0 0.0
        %1316 = vmatpush2.xpose.msra.mxu0 0.0
        %1317 = vmatprep.subr.mxu0 0.0
        %1318 = vmatpush2.xpose.msra.mxu0 0.0
        %1319 = vmatprep.subr.mxu0 0.0
        %1320 = vmatpush2.xpose.msra.mxu0 0.0
        %1321 = vmatprep.subr.mxu0 0.0
        %1322 = vmatpush2.xpose.msra.mxu0 0.0
        %1323 = vmatprep.mubr.f32.mxu0 0.0
        %1324 = vmatmul.mubr.f32.gmra.mxu0 %v1255
        %v1325 = vpop.f32.mrf.mxu0
        %v1326 = vadd.f32 0.0, %v1325
        %v1327 = vpop.f32.mrf.mxu0
        %1328 = vdwg.mxu0
        %v1329 = vsel %vm908, %v1326, -3.4028235e+38
        %v1330 = vsel %vm909, %v1329, -inf
        %1331 = vmax.xlane.f32.xlu0 %v1330
        %v1332 = vpop.xlane.xlu0 %1331
        %v1333 = vsub.f32 %v1329, %v1332
        %v1334 = vmul.f32 %v1333, 1.442695
        %v1335 = vpow.pop %v1334
        %v1336 = vsel %vm909, %v1335, 0.0
        %1337 = vadd.xlane.f32.xlu0 %v1336
        %v1338 = vpop.xlane.xlu0 %1337
        %v1339 = vrcp.pop %v1338
        %v1340 = vmul.f32 %v1338, %v1339
        %v1341 = vsub.f32 2.0, %v1340
        %v1342 = vmul.f32 %v1339, %v1341
        %1343 = vrot.lane.b32.xlu0 %v906, 112
        %v1344 = vpop.permute.xlu0 %1343
        %v1347 = vsel %vm909, %v1335, 0
        %1349 = vmatprep.subr.mxu0 0.0
        %1350 = vmatpush1.msra.mxu0 0.0
        %1351 = vmatprep.subr.mxu0 0.0
        %1352 = vmatpush1.msra.mxu0 0.0
        %1353 = vmatprep.subr.mxu0 0.0
        %1354 = vmatpush1.msra.mxu0 0.0
        %1355 = vmatprep.subr.mxu0 0.0
        %1356 = vmatpush1.msra.mxu0 0.0
        %1357 = vmatprep.subr.mxu0 0.0
        %1358 = vmatpush1.msra.mxu0 0.0
        %1359 = vmatprep.subr.mxu0 0.0
        %1360 = vmatpush1.msra.mxu0 0.0
        %1361 = vmatprep.subr.mxu0 0.0
        %1362 = vmatpush1.msra.mxu0 0.0
        %1363 = vmatprep.subr.mxu0 0.0
        %1364 = vmatpush1.msra.mxu0 0.0
        %1365 = vmatprep.subr.mxu0 0.0
        %1366 = vmatpush1.msra.mxu0 0.0
        %1367 = vmatprep.subr.mxu0 0.0
        %1368 = vmatpush1.msra.mxu0 0.0
        %1369 = vmatprep.subr.mxu0 0.0
        %1370 = vmatpush1.msra.mxu0 0.0
        %1371 = vmatprep.subr.mxu0 0.0
        %1372 = vmatpush1.msra.mxu0 0.0
        %1373 = vmatprep.subr.mxu0 0.0
        %1374 = vmatpush1.msra.mxu0 0.0
        %1375 = vmatprep.subr.mxu0 0.0
        %1376 = vmatpush1.msra.mxu0 0.0
        %1377 = vmatprep.subr.mxu0 0.0
        %1378 = vmatpush1.msra.mxu0 0.0
        %1379 = vmatprep.subr.mxu0 0.0
        %1380 = vmatpush1.msra.mxu0 %v1344
        %1381 = vmatprep.subr.mxu0 0.0
        %1382 = vmatpush2.msra.mxu0 0.0
        %1383 = vmatprep.subr.mxu0 0.0
        %1384 = vmatpush2.msra.mxu0 0.0
        %1385 = vmatprep.subr.mxu0 0.0
        %1386 = vmatpush2.msra.mxu0 0.0
        %1387 = vmatprep.subr.mxu0 0.0
        %1388 = vmatpush2.msra.mxu0 0.0
        %1389 = vmatprep.subr.mxu0 0.0
        %1390 = vmatpush2.msra.mxu0 0.0
        %1391 = vmatprep.subr.mxu0 0.0
        %1392 = vmatpush2.msra.mxu0 0.0
        %1393 = vmatprep.subr.mxu0 0.0
        %1394 = vmatpush2.msra.mxu0 0.0
        %1395 = vmatprep.subr.mxu0 0.0
        %1396 = vmatpush2.msra.mxu0 0.0
        %1397 = vmatprep.subr.mxu0 0.0
        %1398 = vmatpush2.msra.mxu0 0.0
        %1399 = vmatprep.subr.mxu0 0.0
        %1400 = vmatpush2.msra.mxu0 0.0
        %1401 = vmatprep.subr.mxu0 0.0
        %1402 = vmatpush2.msra.mxu0 0.0
        %1403 = vmatprep.subr.mxu0 0.0
        %1404 = vmatpush2.msra.mxu0 0.0
        %1405 = vmatprep.subr.mxu0 0.0
        %1406 = vmatpush2.msra.mxu0 0.0
        %1407 = vmatprep.subr.mxu0 0.0
        %1408 = vmatpush2.msra.mxu0 0.0
        %1409 = vmatprep.subr.mxu0 0.0
        %1410 = vmatpush2.msra.mxu0 0.0
        %1411 = vmatprep.subr.mxu0 0.0
        %1412 = vmatpush2.msra.mxu0 0.0
        %1413 = vmatprep.mubr.f32.mxu0 0.0
        %1414 = vmatmul.mubr.f32.gmra.mxu0 %v1347
        %v1415 = vpop.f32.mrf.mxu0
        %v1416 = vadd.f32 0.0, %v1415
        %v1417 = vpop.f32.mrf.mxu0
        %1418 = vdwg.mxu0
        %v1419 = vmul.f32 %v1416, %v1342
        %1421 = vrot.lane.b32.xlu0 %v1419, 16
        %v1422 = vpop.permute.xlu0 %1421
        %vm1424 = vcmask 195712
        %1425 = vst.msk [vmem:[#allocation3] sm:$0xff] %vm1424, %v1422
        %1426 = vrot.lane.b32.xlu0 %v899, 104
        %v1427 = vpop.permute.xlu0 %1426
        %1428 = vrot.lane.b32.xlu0 %v904, 104
        %v1429 = vpop.permute.xlu0 %1428
        %v1430 = vsel %vm909, %v1427, 0
        %v1432 = vsel %vm909, %v1429, 0
        %1434 = vmatprep.subr.mxu0 0.0
        %1435 = vmatpush1.xpose.msra.mxu0 0.0
        %1436 = vmatprep.subr.mxu0 0.0
        %1437 = vmatpush1.xpose.msra.mxu0 0.0
        %1438 = vmatprep.subr.mxu0 0.0
        %1439 = vmatpush1.xpose.msra.mxu0 0.0
        %1440 = vmatprep.subr.mxu0 0.0
        %1441 = vmatpush1.xpose.msra.mxu0 0.0
        %1442 = vmatprep.subr.mxu0 0.0
        %1443 = vmatpush1.xpose.msra.mxu0 0.0
        %1444 = vmatprep.subr.mxu0 0.0
        %1445 = vmatpush1.xpose.msra.mxu0 0.0
        %1446 = vmatprep.subr.mxu0 0.0
        %1447 = vmatpush1.xpose.msra.mxu0 0.0
        %1448 = vmatprep.subr.mxu0 0.0
        %1449 = vmatpush1.xpose.msra.mxu0 0.0
        %1450 = vmatprep.subr.mxu0 0.0
        %1451 = vmatpush1.xpose.msra.mxu0 0.0
        %1452 = vmatprep.subr.mxu0 0.0
        %1453 = vmatpush1.xpose.msra.mxu0 0.0
        %1454 = vmatprep.subr.mxu0 0.0
        %1455 = vmatpush1.xpose.msra.mxu0 0.0
        %1456 = vmatprep.subr.mxu0 0.0
        %1457 = vmatpush1.xpose.msra.mxu0 0.0
        %1458 = vmatprep.subr.mxu0 0.0
        %1459 = vmatpush1.xpose.msra.mxu0 0.0
        %1460 = vmatprep.subr.mxu0 0.0
        %1461 = vmatpush1.xpose.msra.mxu0 0.0
        %1462 = vmatprep.subr.mxu0 0.0
        %1463 = vmatpush1.xpose.msra.mxu0 0.0
        %1464 = vmatprep.subr.mxu0 0.0
        %1465 = vmatpush1.xpose.msra.mxu0 %v1432
        %1466 = vmatprep.subr.mxu0 0.0
        %1467 = vmatpush2.xpose.msra.mxu0 0.0
        %1468 = vmatprep.subr.mxu0 0.0
        %1469 = vmatpush2.xpose.msra.mxu0 0.0
        %1470 = vmatprep.subr.mxu0 0.0
        %1471 = vmatpush2.xpose.msra.mxu0 0.0
        %1472 = vmatprep.subr.mxu0 0.0
        %1473 = vmatpush2.xpose.msra.mxu0 0.0
        %1474 = vmatprep.subr.mxu0 0.0
        %1475 = vmatpush2.xpose.msra.mxu0 0.0
        %1476 = vmatprep.subr.mxu0 0.0
        %1477 = vmatpush2.xpose.msra.mxu0 0.0
        %1478 = vmatprep.subr.mxu0 0.0
        %1479 = vmatpush2.xpose.msra.mxu0 0.0
        %1480 = vmatprep.subr.mxu0 0.0
        %1481 = vmatpush2.xpose.msra.mxu0 0.0
        %1482 = vmatprep.subr.mxu0 0.0
        %1483 = vmatpush2.xpose.msra.mxu0 0.0
        %1484 = vmatprep.subr.mxu0 0.0
        %1485 = vmatpush2.xpose.msra.mxu0 0.0
        %1486 = vmatprep.subr.mxu0 0.0
        %1487 = vmatpush2.xpose.msra.mxu0 0.0
        %1488 = vmatprep.subr.mxu0 0.0
        %1489 = vmatpush2.xpose.msra.mxu0 0.0
        %1490 = vmatprep.subr.mxu0 0.0
        %1491 = vmatpush2.xpose.msra.mxu0 0.0
        %1492 = vmatprep.subr.mxu0 0.0
        %1493 = vmatpush2.xpose.msra.mxu0 0.0
        %1494 = vmatprep.subr.mxu0 0.0
        %1495 = vmatpush2.xpose.msra.mxu0 0.0
        %1496 = vmatprep.subr.mxu0 0.0
        %1497 = vmatpush2.xpose.msra.mxu0 0.0
        %1498 = vmatprep.mubr.f32.mxu0 0.0
        %1499 = vmatmul.mubr.f32.gmra.mxu0 %v1430
        %v1500 = vpop.f32.mrf.mxu0
        %v1501 = vadd.f32 0.0, %v1500
        %v1502 = vpop.f32.mrf.mxu0
        %1503 = vdwg.mxu0
        %v1504 = vsel %vm908, %v1501, -3.4028235e+38
        %v1505 = vsel %vm909, %v1504, -inf
        %1506 = vmax.xlane.f32.xlu0 %v1505
        %v1507 = vpop.xlane.xlu0 %1506
        %v1508 = vsub.f32 %v1504, %v1507
        %v1509 = vmul.f32 %v1508, 1.442695
        %v1510 = vpow.pop %v1509
        %v1511 = vsel %vm909, %v1510, 0.0
        %1512 = vadd.xlane.f32.xlu0 %v1511
        %v1513 = vpop.xlane.xlu0 %1512
        %v1514 = vrcp.pop %v1513
        %v1515 = vmul.f32 %v1513, %v1514
        %v1516 = vsub.f32 2.0, %v1515
        %v1517 = vmul.f32 %v1514, %v1516
        %1518 = vrot.lane.b32.xlu0 %v906, 104
        %v1519 = vpop.permute.xlu0 %1518
        %v1522 = vsel %vm909, %v1510, 0
        %1524 = vmatprep.subr.mxu0 0.0
        %1525 = vmatpush1.msra.mxu0 0.0
        %1526 = vmatprep.subr.mxu0 0.0
        %1527 = vmatpush1.msra.mxu0 0.0
        %1528 = vmatprep.subr.mxu0 0.0
        %1529 = vmatpush1.msra.mxu0 0.0
        %1530 = vmatprep.subr.mxu0 0.0
        %1531 = vmatpush1.msra.mxu0 0.0
        %1532 = vmatprep.subr.mxu0 0.0
        %1533 = vmatpush1.msra.mxu0 0.0
        %1534 = vmatprep.subr.mxu0 0.0
        %1535 = vmatpush1.msra.mxu0 0.0
        %1536 = vmatprep.subr.mxu0 0.0
        %1537 = vmatpush1.msra.mxu0 0.0
        %1538 = vmatprep.subr.mxu0 0.0
        %1539 = vmatpush1.msra.mxu0 0.0
        %1540 = vmatprep.subr.mxu0 0.0
        %1541 = vmatpush1.msra.mxu0 0.0
        %1542 = vmatprep.subr.mxu0 0.0
        %1543 = vmatpush1.msra.mxu0 0.0
        %1544 = vmatprep.subr.mxu0 0.0
        %1545 = vmatpush1.msra.mxu0 0.0
        %1546 = vmatprep.subr.mxu0 0.0
        %1547 = vmatpush1.msra.mxu0 0.0
        %1548 = vmatprep.subr.mxu0 0.0
        %1549 = vmatpush1.msra.mxu0 0.0
        %1550 = vmatprep.subr.mxu0 0.0
        %1551 = vmatpush1.msra.mxu0 0.0
        %1552 = vmatprep.subr.mxu0 0.0
        %1553 = vmatpush1.msra.mxu0 0.0
        %1554 = vmatprep.subr.mxu0 0.0
        %1555 = vmatpush1.msra.mxu0 %v1519
        %1556 = vmatprep.subr.mxu0 0.0
        %1557 = vmatpush2.msra.mxu0 0.0
        %1558 = vmatprep.subr.mxu0 0.0
        %1559 = vmatpush2.msra.mxu0 0.0
        %1560 = vmatprep.subr.mxu0 0.0
        %1561 = vmatpush2.msra.mxu0 0.0
        %1562 = vmatprep.subr.mxu0 0.0
        %1563 = vmatpush2.msra.mxu0 0.0
        %1564 = vmatprep.subr.mxu0 0.0
        %1565 = vmatpush2.msra.mxu0 0.0
        %1566 = vmatprep.subr.mxu0 0.0
        %1567 = vmatpush2.msra.mxu0 0.0
        %1568 = vmatprep.subr.mxu0 0.0
        %1569 = vmatpush2.msra.mxu0 0.0
        %1570 = vmatprep.subr.mxu0 0.0
        %1571 = vmatpush2.msra.mxu0 0.0
        %1572 = vmatprep.subr.mxu0 0.0
        %1573 = vmatpush2.msra.mxu0 0.0
        %1574 = vmatprep.subr.mxu0 0.0
        %1575 = vmatpush2.msra.mxu0 0.0
        %1576 = vmatprep.subr.mxu0 0.0
        %1577 = vmatpush2.msra.mxu0 0.0
        %1578 = vmatprep.subr.mxu0 0.0
        %1579 = vmatpush2.msra.mxu0 0.0
        %1580 = vmatprep.subr.mxu0 0.0
        %1581 = vmatpush2.msra.mxu0 0.0
        %1582 = vmatprep.subr.mxu0 0.0
        %1583 = vmatpush2.msra.mxu0 0.0
        %1584 = vmatprep.subr.mxu0 0.0
        %1585 = vmatpush2.msra.mxu0 0.0
        %1586 = vmatprep.subr.mxu0 0.0
        %1587 = vmatpush2.msra.mxu0 0.0
        %1588 = vmatprep.mubr.f32.mxu0 0.0
        %1589 = vmatmul.mubr.f32.gmra.mxu0 %v1522
        %v1590 = vpop.f32.mrf.mxu0
        %v1591 = vadd.f32 0.0, %v1590
        %v1592 = vpop.f32.mrf.mxu0
        %1593 = vdwg.mxu0
        %v1594 = vmul.f32 %v1591, %v1517
        %1596 = vrot.lane.b32.xlu0 %v1594, 24
        %v1597 = vpop.permute.xlu0 %1596
        %vm1599 = vcmask 261312
        %1600 = vst.msk [vmem:[#allocation3] sm:$0xff] %vm1599, %v1597
        %v1601 = vld [vmem:[#allocation2] sm:$0xff]
        %v1602 = vld [vmem:[#allocation3] sm:$0xff]
        %s1603 = scalar_lea.vmem [#allocation18], %s814
        %v1604 = vld [vmem:[%s1603] sm:$0xff]
        %v1605 = vld [vmem:[%s1603 + $0x8] sm:$0xff]
        %v1606 = vld [vmem:[%s1603 + $0x10] sm:$0xff]
        %v1607 = vld [vmem:[%s1603 + $0x18] sm:$0xff]
        %v1609 = vsel %vm828, %v1602, 0
        %1611 = vmatprep.subr.mxu0 0.0
        %1612 = vmatpush1.msra.mxu0 0.0
        %1613 = vmatprep.subr.mxu0 0.0
        %1614 = vmatpush1.msra.mxu0 0.0
        %1615 = vmatprep.subr.mxu0 0.0
        %1616 = vmatpush1.msra.mxu0 0.0
        %1617 = vmatprep.subr.mxu0 0.0
        %1618 = vmatpush1.msra.mxu0 0.0
        %1619 = vmatprep.subr.mxu0 0.0
        %1620 = vmatpush1.msra.mxu0 0.0
        %1621 = vmatprep.subr.mxu0 0.0
        %1622 = vmatpush1.msra.mxu0 0.0
        %1623 = vmatprep.subr.mxu0 0.0
        %1624 = vmatpush1.msra.mxu0 0.0
        %1625 = vmatprep.subr.mxu0 0.0
        %1626 = vmatpush1.msra.mxu0 0.0
        %1627 = vmatprep.subr.mxu0 0.0
        %1628 = vmatpush1.msra.mxu0 0.0
        %1629 = vmatprep.subr.mxu0 0.0
        %1630 = vmatpush1.msra.mxu0 0.0
        %1631 = vmatprep.subr.mxu0 0.0
        %1632 = vmatpush1.msra.mxu0 0.0
        %1633 = vmatprep.subr.mxu0 0.0
        %1634 = vmatpush1.msra.mxu0 0.0
        %1635 = vmatprep.subr.mxu0 0.0
        %1636 = vmatpush1.msra.mxu0 %v1607
        %1637 = vmatprep.subr.mxu0 0.0
        %1638 = vmatpush1.msra.mxu0 %v1606
        %1639 = vmatprep.subr.mxu0 0.0
        %1640 = vmatpush1.msra.mxu0 %v1605
        %1641 = vmatprep.subr.mxu0 0.0
        %1642 = vmatpush1.msra.mxu0 %v1604
        %1643 = vmatprep.subr.mxu0 0.0
        %1644 = vmatpush2.msra.mxu0 0.0
        %1645 = vmatprep.subr.mxu0 0.0
        %1646 = vmatpush2.msra.mxu0 0.0
        %1647 = vmatprep.subr.mxu0 0.0
        %1648 = vmatpush2.msra.mxu0 0.0
        %1649 = vmatprep.subr.mxu0 0.0
        %1650 = vmatpush2.msra.mxu0 0.0
        %1651 = vmatprep.subr.mxu0 0.0
        %1652 = vmatpush2.msra.mxu0 0.0
        %1653 = vmatprep.subr.mxu0 0.0
        %1654 = vmatpush2.msra.mxu0 0.0
        %1655 = vmatprep.subr.mxu0 0.0
        %1656 = vmatpush2.msra.mxu0 0.0
        %1657 = vmatprep.subr.mxu0 0.0
        %1658 = vmatpush2.msra.mxu0 0.0
        %1659 = vmatprep.subr.mxu0 0.0
        %1660 = vmatpush2.msra.mxu0 0.0
        %1661 = vmatprep.subr.mxu0 0.0
        %1662 = vmatpush2.msra.mxu0 0.0
        %1663 = vmatprep.subr.mxu0 0.0
        %1664 = vmatpush2.msra.mxu0 0.0
        %1665 = vmatprep.subr.mxu0 0.0
        %1666 = vmatpush2.msra.mxu0 0.0
        %1667 = vmatprep.subr.mxu0 0.0
        %1668 = vmatpush2.msra.mxu0 0.0
        %1669 = vmatprep.subr.mxu0 0.0
        %1670 = vmatpush2.msra.mxu0 0.0
        %1671 = vmatprep.subr.mxu0 0.0
        %1672 = vmatpush2.msra.mxu0 0.0
        %1673 = vmatprep.subr.mxu0 0.0
        %1674 = vmatpush2.msra.mxu0 0.0
        %1675 = vmatprep.mubr.f32.mxu0 0.0
        %1676 = vmatmul.mubr.f32.gmra.mxu0 %v1609
        %v1677 = vpop.f32.mrf.mxu0
        %v1678 = vadd.f32 0.0, %v1677
        %v1679 = vpop.f32.mrf.mxu0
        %1680 = vdwg.mxu0
        %v1681 = vadd.f32 %v1601, %v1678
        %1682 = vst.msk [vmem:[#allocation2] sm:$0xff] %vm828, %v1681
        // Predicated region
        $region109: #{tpu_custom_call.1} parent=67 // pred_check
          %p1683 = pneg %p622
        $region110: #{tpu_custom_call.1} parent=67 // pred_check_branch
          %1685 = sbr.rel (%p1683) target = $region112
        $region111: #{tpu_custom_call.1} parent=67 // pred_region
          %v1686 = vld [vmem:[#allocation2] sm:$0xff]
          %v1687 = vld [vmem:[%s11] sm:$0x1]
          %v1689 = vlaneseq
          %v1690 = vshrl.u32 %v1689, 7
          %v1691 = vsub.s32 0, %v1690
          %v1692 = vrot.slane %v1687, %v1691
          %v1694 = vadd.f32 %v1686, %v1692
          %1695 = vst.msk [vmem:[%s621] sm:$0xff] %vm828, %v1694
        $region112: #{tpu_custom_call.1} parent=67 // pred_fallthru
          _
        %s1696 = sand.u32 %s342, 1
        %s1697 = scalar_lea.sflag [#allocation8], %s1696
        %s1698 = sand.u32 %s342, 1
        %s1699 = smul.addr %s1698, 8
        %s1700 = scalar_lea.vmem [#allocation20], %s1699
        // Predicated region
        $region113: #{tpu_custom_call.1} parent=67 // pred_check
          %p1701 = pneg %p352
        $region114: #{tpu_custom_call.1} parent=67 // pred_check_branch
          %1703 = sbr.rel (%p1701) target = $region116
        $region115: #{tpu_custom_call.1} parent=67 // pred_region
          %s1705 = ssub.s32 128, 128
          %1706 = vsyncadd %s1697, %s1705
          %s1707 = sadd.s32 %s43, %s42
          %s1708 = smul.addr %s1707, 128
          %s1709 = scalar_lea.hbm %s12, %s1708
          %s1711 = sshll.u32 %s1700, 4
          %s1712 = int_to_ptr.vmem [resolvable:$true] %s1711
          %1714 = dma.vmem_to_hbm [thread:$0]  %s1712, 128, %s1709, %s1697
        $region116: #{tpu_custom_call.1} parent=67 // pred_fallthru
          _
      $region68: #{tpu_custom_call.1} parent=5 // pred_fallthru
        _
      %p1715 = scmp.le.s32.totalorder 2, %s32
      // Predicated region
      $region117: #{tpu_custom_call.1} parent=5 // pred_check
        %p1716 = pneg %p1715
      $region118: #{tpu_custom_call.1} parent=5 // pred_check_branch
        %1718 = sbr.rel (%p1716) target = $region120
      $region119: #{tpu_custom_call.1} parent=5 // pred_region
        %s1719 = ssub.s32 %s32, 2
        // Predicated region
        $region121: #{tpu_custom_call.1} parent=119 // pred_check
          %p1720 = pneg %p358
        $region122: #{tpu_custom_call.1} parent=119 // pred_check_branch
          %1722 = sbr.rel (%p1720) target = $region124
        $region123: #{tpu_custom_call.1} parent=119 // pred_region
          %s1723 = sand.u32 %s343, 1
          %s1724 = scalar_lea.sflag [#allocation8], %s1723
          %s1725 = sand.u32 %s343, 1
          %s1726 = smul.addr %s1725, 8
          %s1727 = scalar_lea.vmem [#allocation20], %s1726
          %1728 = dma.done %s1724, 128
        $region124: #{tpu_custom_call.1} parent=119 // pred_fallthru
          _
      $region120: #{tpu_custom_call.1} parent=5 // pred_fallthru
        _
    $region6: #{tpu_custom_call.1} parent=1 // loop_footer
      %s36 = sadd.s32 1, %s32
    $region7: #{tpu_custom_call.1} parent=1 // loop_footer_branch
      %31 = sbr.rel target = $region3
    $region8: #{tpu_custom_call.1} parent=1 // loop_exit
      _
    %1729 = vsyncpa [#allocation7], 1
    %s1730 = scalar_lea.sflag [#allocation7], 1
    %1731 = vsyncpa %s1730, 1
    %1732 = vsyncpa [#allocation10], 1
    %s1733 = scalar_lea.sflag [#allocation10], 1
    %1734 = vsyncpa %s1733, 1
    %1735 = vsyncpa [#allocation13], 1
    %s1736 = scalar_lea.sflag [#allocation13], 1
    %1737 = vsyncpa %s1736, 1
    %1738 = vsyncpa [#allocation16], 1
    %1739 = vsyncpa [#allocation19], 1
    %1740 = vsyncpa [#allocation8], 1
    %s1741 = scalar_lea.sflag [#allocation8], 1
    %1742 = vsyncpa %s1741, 1

</llo_original>
